<compile_context>
chip_gen: v7x
topology: tpu7x:2x2x1
jax: 0.10.0
libtpu: 0.0.40
codegen_flags: <defaults>
</compile_context>

<pallas_src>
import functools
import math

import jax
import jax.numpy as jnp
from jax.experimental import pallas as pl
from jax.experimental.pallas import tpu as pltpu


def _round_up(x, m):
    return -(-x // m) * m


# -----------------------------------------------------------------------------
# Kernel: whole FinalTanh MLP for one batch tile
# -----------------------------------------------------------------------------
def finaltanh_kernel(*refs, num_hidden_layers):
    """relu(z@W_in+b) -> [relu(.@W_k+b_k)]*(L-1) -> tanh(.@W_out+b_out).

    Weights are (in, out) bf16; biases are (1, out) f32 lane rows. Matmuls run
    bf16 x bf16 -> f32 on the MXU; elementwise math is f32. The row-major
    .view(hidden, input) reshape happens in the wrapper (metadata only).
    """
    if num_hidden_layers > 1:
        (z_ref, w_in_ref, b_in_ref, w_hid_ref, b_hid_ref,
         w_out_ref, b_out_ref, out_ref) = refs
    else:
        z_ref, w_in_ref, b_in_ref, w_out_ref, b_out_ref, out_ref = refs
        w_hid_ref = b_hid_ref = None

    w_in = w_in_ref[...]
    z = jnp.dot(z_ref[...].astype(w_in.dtype), w_in,
                preferred_element_type=jnp.float32)
    z = jnp.maximum(z + b_in_ref[...], 0.0)

    # Static unroll; each stacked weight/bias slice is loaded exactly once.
    for l in range(num_hidden_layers - 1):
        w = w_hid_ref[l]
        z = jnp.dot(z.astype(w.dtype), w, preferred_element_type=jnp.float32)
        z = jnp.maximum(z + b_hid_ref[l], 0.0)

    w_out = w_out_ref[...]
    z = jnp.dot(z.astype(w_out.dtype), w_out, preferred_element_type=jnp.float32)
    out_ref[...] = jnp.tanh(z + b_out_ref[...])


# -----------------------------------------------------------------------------
# Wrapper
# -----------------------------------------------------------------------------
def finaltanh_forward(t, z, params, *, input_size, hidden_size,
                      hidden_hidden_size, num_hidden_layers):
    """Mirrors FinalTanh.forward(t, z); t is ignored (as in the module)."""
    del t
    lead = z.shape[:-1]
    assert z.shape[-1] == hidden_size
    H, Hh = hidden_size, hidden_hidden_size
    n_hid = num_hidden_layers - 1
    out_dim = input_size * hidden_size
    out_dim_pad = params["b_out"].shape[-1]          # padded to 128 lanes

    zf = z.reshape(-1, hidden_size).astype(jnp.float32)
    B = zf.shape[0]

    # --- batch tile policy: big tiles, >=2 tiles when possible (v7x 2 TCs) ---
    TILE = 256
    B8 = max(8, _round_up(B, 8))
    n_tiles = max(1, -(-B8 // TILE))
    if B8 >= 16:
        n_tiles = max(n_tiles, 2)
    block_b = _round_up(-(-B8 // n_tiles), 8)
    B_pad = n_tiles * block_b
    if B_pad != B:
        zf = jnp.pad(zf, ((0, B_pad - B), (0, 0)))
    grid = (n_tiles,)

    # --- VMEM budget from actual residency (weights assumed double-buffered
    #     as worst case so the fallback path also fits) ---
    w_bytes = (H * Hh + n_hid * Hh * Hh + Hh * out_dim_pad) * 2      # bf16
    b_bytes = (Hh + n_hid * Hh + out_dim_pad) * 4                    # f32
    act_bytes = 2 * block_b * H * 4                                  # in tile x2
    out_bytes = 2 * block_b * out_dim_pad * 4                        # out tile x2
    interm_bytes = 4 * block_b * Hh * 4                              # live f32 temps
    need = 2 * (w_bytes + b_bytes) + act_bytes + out_bytes + interm_bytes
    vmem_limit = int(min(max(2 * need, 16 << 20), 64 << 20))

    def _run(single_buffer_weights):
        def wspec(shape, imap):
            # Constant-index weights: single-buffer to halve VMEM residency.
            if single_buffer_weights:
                return pl.BlockSpec(shape, imap, pipeline_mode=pl.Buffered(1))
            return pl.BlockSpec(shape, imap)

        in_specs = [
            pl.BlockSpec((block_b, H), lambda i: (i, 0)),            # activations
            wspec((H, Hh), lambda i: (0, 0)),                        # w_in_t
            wspec((1, Hh), lambda i: (0, 0)),                        # b_in
        ]
        operands = [zf, params["w_in_t"], params["b_in"]]
        if n_hid > 0:
            in_specs += [
                wspec((n_hid, Hh, Hh), lambda i: (0, 0, 0)),         # w_hid_t
                wspec((n_hid, 1, Hh), lambda i: (0, 0, 0)),          # b_hid
            ]
            operands += [params["w_hid_t"], params["b_hid"]]
        in_specs += [
            wspec((Hh, out_dim_pad), lambda i: (0, 0)),              # w_out_t
            wspec((1, out_dim_pad), lambda i: (0, 0)),               # b_out
        ]
        operands += [params["w_out_t"], params["b_out"]]

        return pl.pallas_call(
            functools.partial(finaltanh_kernel,
                              num_hidden_layers=num_hidden_layers),
            out_shape=jax.ShapeDtypeStruct((B_pad, out_dim_pad), jnp.float32),
            grid=grid,
            in_specs=in_specs,
            out_specs=pl.BlockSpec((block_b, out_dim_pad), lambda i: (i, 0)),
            compiler_params=pltpu.CompilerParams(
                dimension_semantics=("parallel",),   # batch tiles -> both TCs on v7x
                vmem_limit_bytes=vmem_limit),
        )(*operands)

    try:
        out = _run(True)
    except Exception:
        # Fallback: default (double-buffered) weight pipelining.
        out = _run(False)

    if B_pad != B or out_dim_pad != out_dim:
        out = out[:B, :out_dim]
    return out.reshape(*lead, hidden_size, input_size)


# -----------------------------------------------------------------------------
# Deterministic parameter init (xavier_uniform weights, bias = 0.01)
# -----------------------------------------------------------------------------
def _xavier_uniform(key, out_dim, in_dim):
    limit = math.sqrt(6.0 / (in_dim + out_dim))
    return jax.random.uniform(key, (out_dim, in_dim), jnp.float32,
                              minval=-limit, maxval=limit)


def init_params(key, input_size, hidden_size, hidden_hidden_size,
                num_hidden_layers, *, compute_dtype=jnp.bfloat16):
    Hh = hidden_hidden_size
    out_dim = input_size * hidden_size
    out_dim_pad = max(128, _round_up(out_dim, 128))   # lane-dense output slab
    n_hid = num_hidden_layers - 1
    keys = jax.random.split(key, 2 + max(n_hid, 1))

    w_in = _xavier_uniform(keys[0], Hh, hidden_size)                # (out, in)
    w_out = _xavier_uniform(keys[1], out_dim, Hh)
    w_out_t = jnp.zeros((Hh, out_dim_pad), jnp.float32).at[:, :out_dim].set(w_out.T)
    b_out = jnp.zeros((1, out_dim_pad), jnp.float32).at[:, :out_dim].set(0.01)

    params = {
        "w_in_t": w_in.T.astype(compute_dtype),                     # (hidden, Hh)
        "b_in": jnp.full((1, Hh), 0.01, jnp.float32),
        "w_out_t": w_out_t.astype(compute_dtype),                   # (Hh, out_pad)
        "b_out": b_out,
    }
    if n_hid > 0:
        w_hid = jnp.stack([_xavier_uniform(keys[2 + l], Hh, Hh).T
                           for l in range(n_hid)])                  # (n_hid, Hh, Hh)
        params["w_hid_t"] = w_hid.astype(compute_dtype)
        params["b_hid"] = jnp.full((n_hid, 1, Hh), 0.01, jnp.float32)
    return params


# Pure-JAX reference (f32 math on the same quantized weights) for correctness.
def finaltanh_reference(z, params, *, input_size, hidden_size,
                        num_hidden_layers):
    out_dim = input_size * hidden_size
    x = z.reshape(-1, hidden_size).astype(jnp.float32)
    x = jnp.maximum(x @ params["w_in_t"].astype(jnp.float32) + params["b_in"], 0.0)
    for l in range(num_hidden_layers - 1):
        x = jnp.maximum(x @ params["w_hid_t"][l].astype(jnp.float32)
                        + params["b_hid"][l], 0.0)
    x = jnp.tanh(x @ params["w_out_t"].astype(jnp.float32) + params["b_out"])
    x = x[:, :out_dim]
    return x.reshape(*z.shape[:-1], hidden_size, input_size)


# -----------------------------------------------------------------------------
if __name__ == "__main__":
    key = jax.random.PRNGKey(0)
    k1, k2, k3, k4 = jax.random.split(key, 4)
    t = jnp.float32(0.0)           # forward(t, z) ignores t
    TOL = 3e-2                     # bf16 matmul operands vs f32 reference

    # Config 1: lane-dense out_dim (=128), 3 layers, leading dims (4, 8) -> B=32
    # (2 parallel batch tiles of 16 rows).
    c1 = dict(input_size=4, hidden_size=32, hidden_hidden_size=128,
              num_hidden_layers=3)
    z1 = jax.random.normal(k1, (4, 8, c1["hidden_size"]), jnp.float32)
    p1 = init_params(k2, **c1)
    out1 = finaltanh_forward(t, z1, p1, **c1)
    jax.block_until_ready(out1)
    ref1 = finaltanh_reference(z1, p1, input_size=c1["input_size"],
                               hidden_size=c1["hidden_size"],
                               num_hidden_layers=c1["num_hidden_layers"])
    assert out1.shape == (4, 8, c1["hidden_size"], c1["input_size"])
    assert bool(jnp.all(jnp.isfinite(out1)))
    assert bool(jnp.max(jnp.abs(out1 - ref1)) < TOL)

    # Config 2: exercises batch padding (B=5), out_dim padding (48 -> 128) and
    # the num_hidden_layers == 1 path (no hidden weight stack).
    c2 = dict(input_size=3, hidden_size=16, hidden_hidden_size=64,
              num_hidden_layers=1)
    z2 = jax.random.normal(k3, (5, c2["hidden_size"]), jnp.float32)
    p2 = init_params(k4, **c2)
    out2 = finaltanh_forward(t, z2, p2, **c2)
    jax.block_until_ready(out2)
    ref2 = finaltanh_reference(z2, p2, input_size=c2["input_size"],
                               hidden_size=c2["hidden_size"],
                               num_hidden_layers=c2["num_hidden_layers"])
    assert out2.shape == (5, c2["hidden_size"], c2["input_size"])
    assert bool(jnp.all(jnp.isfinite(out2)))
    assert bool(jnp.max(jnp.abs(out2 - ref2)) < TOL)

    print("KERNEL_OK")
</pallas_src>

<mosaic_0001>
module attributes {stable_mosaic.version = 11 : i64} {
  func.func @finaltanh_kernel(%arg0: i32, %arg1: memref<16x32xf32, #tpu.memory_space<vmem>>, %arg2: memref<32x128xbf16, #tpu.memory_space<vmem>>, %arg3: memref<1x128xf32, #tpu.memory_space<vmem>>, %arg4: memref<2x128x128xbf16, #tpu.memory_space<vmem>>, %arg5: memref<2x1x128xf32, #tpu.memory_space<vmem>>, %arg6: memref<128x128xbf16, #tpu.memory_space<vmem>>, %arg7: memref<1x128xf32, #tpu.memory_space<vmem>>, %arg8: memref<16x128xf32, #tpu.memory_space<vmem>>) attributes {dimension_semantics = [#tpu.dimension_semantics<parallel>], iteration_bounds = array<i64: 2>, scalar_prefetch = 0 : i64, scratch_operands = 0 : i64, tpu.core_type = #tpu.core_type<tc>, window_params = [{transform_indices = @transform_0, window_bounds = array<i64: 16, 32>}, {pipeline_mode = #tpu.pipeline_mode<synchronous>, transform_indices = @transform_1, window_bounds = array<i64: 32, 128>}, {pipeline_mode = #tpu.pipeline_mode<synchronous>, transform_indices = @transform_2, window_bounds = array<i64: 1, 128>}, {pipeline_mode = #tpu.pipeline_mode<synchronous>, transform_indices = @transform_3, window_bounds = array<i64: 2, 128, 128>}, {pipeline_mode = #tpu.pipeline_mode<synchronous>, transform_indices = @transform_4, window_bounds = array<i64: 2, 1, 128>}, {pipeline_mode = #tpu.pipeline_mode<synchronous>, transform_indices = @transform_5, window_bounds = array<i64: 128, 128>}, {pipeline_mode = #tpu.pipeline_mode<synchronous>, transform_indices = @transform_6, window_bounds = array<i64: 1, 128>}, {transform_indices = @transform_7, window_bounds = array<i64: 16, 128>}]} {
    %c0 = arith.constant 0 : index
    %c0_0 = arith.constant 0 : index
    %0 = vector.load %arg2[%c0, %c0_0] : memref<32x128xbf16, #tpu.memory_space<vmem>>, vector<32x128xbf16>
    %c0_1 = arith.constant 0 : index
    %c0_2 = arith.constant 0 : index
    %1 = vector.load %arg1[%c0_1, %c0_2] : memref<16x32xf32, #tpu.memory_space<vmem>>, vector<16x32xf32>
    %2 = arith.truncf %1 : vector<16x32xf32> to vector<16x32xbf16>
    %cst = arith.constant dense<0.000000e+00> : vector<16x128xf32>
    %3 = tpu.matmul %2, %0, %cst {dimension_numbers = #tpu.dot_dimension_numbers<[1], [0], [0], [1], [0, 0, 1, 1], [], []>} : vector<16x32xbf16>, vector<32x128xbf16>, vector<16x128xf32> -> vector<16x128xf32>
    %c0_3 = arith.constant 0 : index
    %c0_4 = arith.constant 0 : index
    %4 = vector.load %arg3[%c0_3, %c0_4] : memref<1x128xf32, #tpu.memory_space<vmem>>, vector<1x128xf32>
    %5 = vector.broadcast %4 : vector<1x128xf32> to vector<16x128xf32>
    %6 = arith.addf %3, %5 : vector<16x128xf32>
    %cst_5 = arith.constant 0.000000e+00 : f32
    %7 = vector.broadcast %cst_5 : f32 to vector<16x128xf32>
    %8 = arith.maximumf %6, %7 : vector<16x128xf32>
    %c0_6 = arith.constant 0 : index
    %c0_7 = arith.constant 0 : index
    %c0_8 = arith.constant 0 : index
    %9 = vector.load %arg4[%c0_6, %c0_7, %c0_8] : memref<2x128x128xbf16, #tpu.memory_space<vmem>>, vector<1x128x128xbf16>
    %10 = vector.shape_cast %9 : vector<1x128x128xbf16> to vector<128x128xbf16>
    %11 = arith.truncf %8 : vector<16x128xf32> to vector<16x128xbf16>
    %cst_9 = arith.constant dense<0.000000e+00> : vector<16x128xf32>
    %12 = tpu.matmul %11, %10, %cst_9 {dimension_numbers = #tpu.dot_dimension_numbers<[1], [0], [0], [1], [0, 0, 1, 1], [], []>} : vector<16x128xbf16>, vector<128x128xbf16>, vector<16x128xf32> -> vector<16x128xf32>
    %c0_10 = arith.constant 0 : index
    %c0_11 = arith.constant 0 : index
    %c0_12 = arith.constant 0 : index
    %13 = vector.load %arg5[%c0_10, %c0_11, %c0_12] : memref<2x1x128xf32, #tpu.memory_space<vmem>>, vector<1x1x128xf32>
    %14 = vector.shape_cast %13 : vector<1x1x128xf32> to vector<1x128xf32>
    %15 = vector.broadcast %14 : vector<1x128xf32> to vector<16x128xf32>
    %16 = arith.addf %12, %15 : vector<16x128xf32>
    %cst_13 = arith.constant 0.000000e+00 : f32
    %17 = vector.broadcast %cst_13 : f32 to vector<16x128xf32>
    %18 = arith.maximumf %16, %17 : vector<16x128xf32>
    %c1 = arith.constant 1 : index
    %c0_14 = arith.constant 0 : index
    %c0_15 = arith.constant 0 : index
    %19 = vector.load %arg4[%c1, %c0_14, %c0_15] : memref<2x128x128xbf16, #tpu.memory_space<vmem>>, vector<1x128x128xbf16>
    %20 = vector.shape_cast %19 : vector<1x128x128xbf16> to vector<128x128xbf16>
    %21 = arith.truncf %18 : vector<16x128xf32> to vector<16x128xbf16>
    %cst_16 = arith.constant dense<0.000000e+00> : vector<16x128xf32>
    %22 = tpu.matmul %21, %20, %cst_16 {dimension_numbers = #tpu.dot_dimension_numbers<[1], [0], [0], [1], [0, 0, 1, 1], [], []>} : vector<16x128xbf16>, vector<128x128xbf16>, vector<16x128xf32> -> vector<16x128xf32>
    %c1_17 = arith.constant 1 : index
    %c0_18 = arith.constant 0 : index
    %c0_19 = arith.constant 0 : index
    %23 = vector.load %arg5[%c1_17, %c0_18, %c0_19] : memref<2x1x128xf32, #tpu.memory_space<vmem>>, vector<1x1x128xf32>
    %24 = vector.shape_cast %23 : vector<1x1x128xf32> to vector<1x128xf32>
    %25 = vector.broadcast %24 : vector<1x128xf32> to vector<16x128xf32>
    %26 = arith.addf %22, %25 : vector<16x128xf32>
    %cst_20 = arith.constant 0.000000e+00 : f32
    %27 = vector.broadcast %cst_20 : f32 to vector<16x128xf32>
    %28 = arith.maximumf %26, %27 : vector<16x128xf32>
    %c0_21 = arith.constant 0 : index
    %c0_22 = arith.constant 0 : index
    %29 = vector.load %arg6[%c0_21, %c0_22] : memref<128x128xbf16, #tpu.memory_space<vmem>>, vector<128x128xbf16>
    %30 = arith.truncf %28 : vector<16x128xf32> to vector<16x128xbf16>
    %cst_23 = arith.constant dense<0.000000e+00> : vector<16x128xf32>
    %31 = tpu.matmul %30, %29, %cst_23 {dimension_numbers = #tpu.dot_dimension_numbers<[1], [0], [0], [1], [0, 0, 1, 1], [], []>} : vector<16x128xbf16>, vector<128x128xbf16>, vector<16x128xf32> -> vector<16x128xf32>
    %c0_24 = arith.constant 0 : index
    %c0_25 = arith.constant 0 : index
    %32 = vector.load %arg7[%c0_24, %c0_25] : memref<1x128xf32, #tpu.memory_space<vmem>>, vector<1x128xf32>
    %33 = vector.broadcast %32 : vector<1x128xf32> to vector<16x128xf32>
    %34 = arith.addf %31, %33 : vector<16x128xf32>
    %35 = math.tanh %34 : vector<16x128xf32>
    %c0_26 = arith.constant 0 : index
    %c0_27 = arith.constant 0 : index
    %36 = vector.load %arg8[%c0_26, %c0_27] : memref<16x128xf32, #tpu.memory_space<vmem>>, vector<16x128xf32>
    tpu.vector_store %arg8[%c0_26, %c0_27], %35 {strides = array<i32>} : memref<16x128xf32, #tpu.memory_space<vmem>>, vector<16x128xf32>,
    return
  }
  func.func @transform_0(%arg0: i32) -> (i32, i32) {
    %c0_i32 = arith.constant 0 : i32
    %c0_i32_0 = arith.constant 0 : i32
    return %arg0, %c0_i32 : i32, i32
  }
  func.func @transform_1(%arg0: i32) -> (i32, i32) {
    %c0_i32 = arith.constant 0 : i32
    %c0_i32_0 = arith.constant 0 : i32
    %c0_i32_1 = arith.constant 0 : i32
    return %c0_i32, %c0_i32_0 : i32, i32
  }
  func.func @transform_2(%arg0: i32) -> (i32, i32) {
    %c0_i32 = arith.constant 0 : i32
    %c0_i32_0 = arith.constant 0 : i32
    %c0_i32_1 = arith.constant 0 : i32
    return %c0_i32, %c0_i32_0 : i32, i32
  }
  func.func @transform_3(%arg0: i32) -> (i32, i32, i32) {
    %c0_i32 = arith.constant 0 : i32
    %c0_i32_0 = arith.constant 0 : i32
    %c0_i32_1 = arith.constant 0 : i32
    %c0_i32_2 = arith.constant 0 : i32
    return %c0_i32, %c0_i32_0, %c0_i32_1 : i32, i32, i32
  }
  func.func @transform_4(%arg0: i32) -> (i32, i32, i32) {
    %c0_i32 = arith.constant 0 : i32
    %c0_i32_0 = arith.constant 0 : i32
    %c0_i32_1 = arith.constant 0 : i32
    %c0_i32_2 = arith.constant 0 : i32
    return %c0_i32, %c0_i32_0, %c0_i32_1 : i32, i32, i32
  }
  func.func @transform_5(%arg0: i32) -> (i32, i32) {
    %c0_i32 = arith.constant 0 : i32
    %c0_i32_0 = arith.constant 0 : i32
    %c0_i32_1 = arith.constant 0 : i32
    return %c0_i32, %c0_i32_0 : i32, i32
  }
  func.func @transform_6(%arg0: i32) -> (i32, i32) {
    %c0_i32 = arith.constant 0 : i32
    %c0_i32_0 = arith.constant 0 : i32
    %c0_i32_1 = arith.constant 0 : i32
    return %c0_i32, %c0_i32_0 : i32, i32
  }
  func.func @transform_7(%arg0: i32) -> (i32, i32) {
    %c0_i32 = arith.constant 0 : i32
    %c0_i32_0 = arith.constant 0 : i32
    return %arg0, %c0_i32 : i32, i32
  }
}

module attributes {stable_mosaic.version = 11 : i64} {
  func.func @finaltanh_kernel(%arg0: i32, %arg1: memref<16x32xf32, #tpu.memory_space<vmem>>, %arg2: memref<32x128xbf16, #tpu.memory_space<vmem>>, %arg3: memref<1x128xf32, #tpu.memory_space<vmem>>, %arg4: memref<2x128x128xbf16, #tpu.memory_space<vmem>>, %arg5: memref<2x1x128xf32, #tpu.memory_space<vmem>>, %arg6: memref<128x128xbf16, #tpu.memory_space<vmem>>, %arg7: memref<1x128xf32, #tpu.memory_space<vmem>>, %arg8: memref<16x128xf32, #tpu.memory_space<vmem>>) attributes {dimension_semantics = [#tpu.dimension_semantics<parallel>], iteration_bounds = array<i64: 2>, scalar_prefetch = 0 : i64, scratch_operands = 0 : i64, tpu.core_type = #tpu.core_type<tc>, window_params = [{transform_indices = @transform_0, window_bounds = array<i64: 16, 32>}, {pipeline_mode = #tpu.pipeline_mode<synchronous>, transform_indices = @transform_1, window_bounds = array<i64: 32, 128>}, {pipeline_mode = #tpu.pipeline_mode<synchronous>, transform_indices = @transform_2, window_bounds = array<i64: 1, 128>}, {pipeline_mode = #tpu.pipeline_mode<synchronous>, transform_indices = @transform_3, window_bounds = array<i64: 2, 128, 128>}, {pipeline_mode = #tpu.pipeline_mode<synchronous>, transform_indices = @transform_4, window_bounds = array<i64: 2, 1, 128>}, {pipeline_mode = #tpu.pipeline_mode<synchronous>, transform_indices = @transform_5, window_bounds = array<i64: 128, 128>}, {pipeline_mode = #tpu.pipeline_mode<synchronous>, transform_indices = @transform_6, window_bounds = array<i64: 1, 128>}, {transform_indices = @transform_7, window_bounds = array<i64: 16, 128>}]} {
    %c0 = arith.constant 0 : index
    %c0_0 = arith.constant 0 : index
    %0 = vector.load %arg2[%c0, %c0_0] : memref<32x128xbf16, #tpu.memory_space<vmem>>, vector<32x128xbf16>
    %c0_1 = arith.constant 0 : index
    %c0_2 = arith.constant 0 : index
    %1 = vector.load %arg1[%c0_1, %c0_2] : memref<16x32xf32, #tpu.memory_space<vmem>>, vector<16x32xf32>
    %2 = arith.truncf %1 : vector<16x32xf32> to vector<16x32xbf16>
    %cst = arith.constant dense<0.000000e+00> : vector<16x128xf32>
    %3 = tpu.matmul %2, %0, %cst {dimension_numbers = #tpu.dot_dimension_numbers<[1], [0], [0], [1], [0, 0, 1, 1], [], []>} : vector<16x32xbf16>, vector<32x128xbf16>, vector<16x128xf32> -> vector<16x128xf32>
    %c0_3 = arith.constant 0 : index
    %c0_4 = arith.constant 0 : index
    %4 = vector.load %arg3[%c0_3, %c0_4] : memref<1x128xf32, #tpu.memory_space<vmem>>, vector<1x128xf32>
    %5 = vector.broadcast %4 : vector<1x128xf32> to vector<16x128xf32>
    %6 = arith.addf %3, %5 : vector<16x128xf32>
    %cst_5 = arith.constant 0.000000e+00 : f32
    %7 = vector.broadcast %cst_5 : f32 to vector<16x128xf32>
    %8 = arith.maximumf %6, %7 : vector<16x128xf32>
    %c0_6 = arith.constant 0 : index
    %c0_7 = arith.constant 0 : index
    %c0_8 = arith.constant 0 : index
    %9 = vector.load %arg4[%c0_6, %c0_7, %c0_8] : memref<2x128x128xbf16, #tpu.memory_space<vmem>>, vector<1x128x128xbf16>
    %10 = vector.shape_cast %9 : vector<1x128x128xbf16> to vector<128x128xbf16>
    %11 = arith.truncf %8 : vector<16x128xf32> to vector<16x128xbf16>
    %cst_9 = arith.constant dense<0.000000e+00> : vector<16x128xf32>
    %12 = tpu.matmul %11, %10, %cst_9 {dimension_numbers = #tpu.dot_dimension_numbers<[1], [0], [0], [1], [0, 0, 1, 1], [], []>} : vector<16x128xbf16>, vector<128x128xbf16>, vector<16x128xf32> -> vector<16x128xf32>
    %c0_10 = arith.constant 0 : index
    %c0_11 = arith.constant 0 : index
    %c0_12 = arith.constant 0 : index
    %13 = vector.load %arg5[%c0_10, %c0_11, %c0_12] : memref<2x1x128xf32, #tpu.memory_space<vmem>>, vector<1x1x128xf32>
    %14 = vector.shape_cast %13 : vector<1x1x128xf32> to vector<1x128xf32>
    %15 = vector.broadcast %14 : vector<1x128xf32> to vector<16x128xf32>
    %16 = arith.addf %12, %15 : vector<16x128xf32>
    %cst_13 = arith.constant 0.000000e+00 : f32
    %17 = vector.broadcast %cst_13 : f32 to vector<16x128xf32>
    %18 = arith.maximumf %16, %17 : vector<16x128xf32>
    %c1 = arith.constant 1 : index
    %c0_14 = arith.constant 0 : index
    %c0_15 = arith.constant 0 : index
    %19 = vector.load %arg4[%c1, %c0_14, %c0_15] : memref<2x128x128xbf16, #tpu.memory_space<vmem>>, vector<1x128x128xbf16>
    %20 = vector.shape_cast %19 : vector<1x128x128xbf16> to vector<128x128xbf16>
    %21 = arith.truncf %18 : vector<16x128xf32> to vector<16x128xbf16>
    %cst_16 = arith.constant dense<0.000000e+00> : vector<16x128xf32>
    %22 = tpu.matmul %21, %20, %cst_16 {dimension_numbers = #tpu.dot_dimension_numbers<[1], [0], [0], [1], [0, 0, 1, 1], [], []>} : vector<16x128xbf16>, vector<128x128xbf16>, vector<16x128xf32> -> vector<16x128xf32>
    %c1_17 = arith.constant 1 : index
    %c0_18 = arith.constant 0 : index
    %c0_19 = arith.constant 0 : index
    %23 = vector.load %arg5[%c1_17, %c0_18, %c0_19] : memref<2x1x128xf32, #tpu.memory_space<vmem>>, vector<1x1x128xf32>
    %24 = vector.shape_cast %23 : vector<1x1x128xf32> to vector<1x128xf32>
    %25 = vector.broadcast %24 : vector<1x128xf32> to vector<16x128xf32>
    %26 = arith.addf %22, %25 : vector<16x128xf32>
    %cst_20 = arith.constant 0.000000e+00 : f32
    %27 = vector.broadcast %cst_20 : f32 to vector<16x128xf32>
    %28 = arith.maximumf %26, %27 : vector<16x128xf32>
    %c0_21 = arith.constant 0 : index
    %c0_22 = arith.constant 0 : index
    %29 = vector.load %arg6[%c0_21, %c0_22] : memref<128x128xbf16, #tpu.memory_space<vmem>>, vector<128x128xbf16>
    %30 = arith.truncf %28 : vector<16x128xf32> to vector<16x128xbf16>
    %cst_23 = arith.constant dense<0.000000e+00> : vector<16x128xf32>
    %31 = tpu.matmul %30, %29, %cst_23 {dimension_numbers = #tpu.dot_dimension_numbers<[1], [0], [0], [1], [0, 0, 1, 1], [], []>} : vector<16x128xbf16>, vector<128x128xbf16>, vector<16x128xf32> -> vector<16x128xf32>
    %c0_24 = arith.constant 0 : index
    %c0_25 = arith.constant 0 : index
    %32 = vector.load %arg7[%c0_24, %c0_25] : memref<1x128xf32, #tpu.memory_space<vmem>>, vector<1x128xf32>
    %33 = vector.broadcast %32 : vector<1x128xf32> to vector<16x128xf32>
    %34 = arith.addf %31, %33 : vector<16x128xf32>
    %35 = math.tanh %34 : vector<16x128xf32>
    %c0_26 = arith.constant 0 : index
    %c0_27 = arith.constant 0 : index
    %36 = vector.load %arg8[%c0_26, %c0_27] : memref<16x128xf32, #tpu.memory_space<vmem>>, vector<16x128xf32>
    tpu.vector_store %arg8[%c0_26, %c0_27], %35 {strides = array<i32>} : memref<16x128xf32, #tpu.memory_space<vmem>>, vector<16x128xf32>,
    return
  }
  func.func @transform_0(%arg0: i32) -> (i32, i32) {
    %c0_i32 = arith.constant 0 : i32
    %c0_i32_0 = arith.constant 0 : i32
    return %arg0, %c0_i32 : i32, i32
  }
  func.func @transform_1(%arg0: i32) -> (i32, i32) {
    %c0_i32 = arith.constant 0 : i32
    %c0_i32_0 = arith.constant 0 : i32
    %c0_i32_1 = arith.constant 0 : i32
    return %c0_i32, %c0_i32_0 : i32, i32
  }
  func.func @transform_2(%arg0: i32) -> (i32, i32) {
    %c0_i32 = arith.constant 0 : i32
    %c0_i32_0 = arith.constant 0 : i32
    %c0_i32_1 = arith.constant 0 : i32
    return %c0_i32, %c0_i32_0 : i32, i32
  }
  func.func @transform_3(%arg0: i32) -> (i32, i32, i32) {
    %c0_i32 = arith.constant 0 : i32
    %c0_i32_0 = arith.constant 0 : i32
    %c0_i32_1 = arith.constant 0 : i32
    %c0_i32_2 = arith.constant 0 : i32
    return %c0_i32, %c0_i32_0, %c0_i32_1 : i32, i32, i32
  }
  func.func @transform_4(%arg0: i32) -> (i32, i32, i32) {
    %c0_i32 = arith.constant 0 : i32
    %c0_i32_0 = arith.constant 0 : i32
    %c0_i32_1 = arith.constant 0 : i32
    %c0_i32_2 = arith.constant 0 : i32
    return %c0_i32, %c0_i32_0, %c0_i32_1 : i32, i32, i32
  }
  func.func @transform_5(%arg0: i32) -> (i32, i32) {
    %c0_i32 = arith.constant 0 : i32
    %c0_i32_0 = arith.constant 0 : i32
    %c0_i32_1 = arith.constant 0 : i32
    return %c0_i32, %c0_i32_0 : i32, i32
  }
  func.func @transform_6(%arg0: i32) -> (i32, i32) {
    %c0_i32 = arith.constant 0 : i32
    %c0_i32_0 = arith.constant 0 : i32
    %c0_i32_1 = arith.constant 0 : i32
    return %c0_i32, %c0_i32_0 : i32, i32
  }
  func.func @transform_7(%arg0: i32) -> (i32, i32) {
    %c0_i32 = arith.constant 0 : i32
    %c0_i32_0 = arith.constant 0 : i32
    return %arg0, %c0_i32 : i32, i32
  }
}

</mosaic_0001>

<llo_original>
// kernel: tpu_custom_call.1
$region0: #{tpu_custom_call.1}
  #allocation0 [shape = 'u32[]', space=smem, size = 0x4, offset = 0x4, fixed_abs, tag = 'smem constant byte address 0x4 - core index']
  #allocation1 [shape = 'u32[144,128]{1,0:T(1,128)}', space=vmem, size = 0x12000, scoped, tag = 'internal scratch']
  %s0 = inlined_call_operand.hbm [shape: f32[32,32], index: 0, kind: input, shape index: {}]
  %s1 = inlined_call_operand.hbm [shape: bf16[32,128], index: 1, kind: input, shape index: {}]
  %s2 = inlined_call_operand.vmem [shape: f32[1,128], index: 2, kind: input, shape index: {}]
  %s3 = inlined_call_operand.hbm [shape: bf16[2,128,128], index: 3, kind: input, shape index: {}]
  %s4 = inlined_call_operand.vmem [shape: f32[2,1,128], index: 4, kind: input, shape index: {}]
  %s5 = inlined_call_operand.hbm [shape: bf16[128,128], index: 5, kind: input, shape index: {}]
  %s6 = inlined_call_operand.vmem [shape: f32[1,128], index: 6, kind: input, shape index: {}]
  %s7 = inlined_call_operand.hbm [shape: f32[32,128], index: 7, kind: output, shape index: {}]
  %s8 = sld [smem:[#allocation0]]
  $region77: #{tpu_custom_call.1} parent=0
    _
  %s10 = ssub.s32 1, %s8
  %s11 = scalar_select 0, %s10, %s8
  $region1: #{tpu_custom_call.1} parent=0
    #allocation2 [shape = 'u8[16384]{0}', space=vmem, size = 0x4000, scoped, tag = 'input window, operand 0']
    #allocation3 [shape = 's32[2]{0}', space=sflag, size = 0x8, scoped, tag = 'scoped memory for tpu_custom_call.1']
    #allocation4 [shape = 's32[2]{0}', space=sflag, size = 0x8, scoped, tag = 'scoped memory for tpu_custom_call.1']
    #allocation5 [shape = 'u8[8192]{0}', space=vmem, size = 0x2000, scoped, tag = 'input window, operand 1, single buffered']
    #allocation6 [shape = 's32[1]{0}', space=sflag, size = 0x4, scoped, tag = 'scoped memory for tpu_custom_call.1']
    #allocation7 [shape = 'u8[65536]{0}', space=vmem, size = 0x10000, scoped, tag = 'input window, operand 3, single buffered']
    #allocation8 [shape = 'u8[32768]{0}', space=vmem, size = 0x8000, scoped, tag = 'input window, operand 5, single buffered']
    #allocation9 [shape = 's32[1]{0}', space=sflag, size = 0x4, scoped, tag = 'scoped memory for tpu_custom_call.1']
    #allocation10 [shape = 'u8[16384]{0}', space=vmem, size = 0x4000, scoped, tag = 'output window, operand 0']
    %12 = vsyncpa [#allocation3], 0
    %s13 = scalar_lea.sflag [#allocation3], 1
    %14 = vsyncpa %s13, 0
    %15 = vsyncpa [#allocation6], 0
    %16 = vsyncpa [#allocation9], 0
    %17 = vsyncpa [#allocation4], 0
    %s18 = scalar_lea.sflag [#allocation4], 1
    %19 = vsyncpa %s18, 0
    loop: start=0, step=1, limit=4
    $region2: #{tpu_custom_call.1} parent=1 // loop_pre_header
      _
    $region3: #{tpu_custom_call.1} parent=1 // loop_header
      %s21 = sphi 0, %s25
      %p22 = scmp.ge.s32.totalorder %s21, 4
      %s31 = sphi 0, %s33
      %s34 = sphi 0, %s31
      %s35 = sphi 0, %s34
      %s51 = sphi 0, %s35
      %s55 = sphi 0, %s55
      %s57 = sphi 0, %s55
      %s58 = sphi 0, %s57
      %s72 = sphi 0, %s58
      %s76 = sphi 0, %s76
      %s78 = sphi 0, %s76
      %s79 = sphi 0, %s78
      %s93 = sphi 0, %s79
      %s97 = sphi 0, %s97
      %s99 = sphi 0, %s97
      %s100 = sphi 0, %s99
      %s114 = sphi 0, %s100
      %s118 = sphi 0, %s118
      %s120 = sphi 0, %s118
      %s121 = sphi 0, %s120
      %s135 = sphi 0, %s121
      %s139 = sphi 0, %s139
      %s141 = sphi 0, %s139
      %s142 = sphi 0, %s141
      %s156 = sphi 0, %s142
      %s160 = sphi 0, %s160
      %s162 = sphi 0, %s160
      %s163 = sphi 0, %s162
      %s177 = sphi 0, %s163
      %s183 = sphi 0, %s185
      %s186 = sphi 0, %s183
      %s187 = sphi 0, %s186
      %s203 = sphi 0, %s187
    $region4: #{tpu_custom_call.1} parent=1 // loop_header_branch
      %24 = sbr.rel (%p22) target = $region8
    $region5: #{tpu_custom_call.1} parent=1 // loop_body
      %s26 = ssub.s32 %s21, 1
      %s27 = ssub.s32 %s21, 2
      %s28 = sadd.s32 %s21, 1
      %s29 = ssub.s32 %s21, %s28
      %p30 = scmp.eq.s32.totalorder %s29, 0
      %s32 = sadd.s32 %s31, 1
      %s33 = scalar_select %p30, %s31, %s32
      %p36 = pneg %p30
      %p37 = scmp.eq.s32.totalorder %s21, 1
      %p38 = por %p36, %p37
      %p39 = scmp.ne.s32.totalorder %s31, %s34
      %p40 = scmp.eq.s32.totalorder %s21, 0
      %p41 = por %p39, %p40
      %p42 = scmp.ne.s32.totalorder %s31, %s34
      %p43 = scmp.eq.s32.totalorder %s26, 1
      %p44 = por %p42, %p43
      %p45 = scmp.ne.s32.totalorder %s34, %s35
      %p46 = scmp.eq.s32.totalorder %s26, 0
      %p47 = por %p45, %p46
      %p48 = scmp.ne.s32.totalorder %s34, %s35
      %p49 = scmp.eq.s32.totalorder %s27, 1
      %p50 = por %p48, %p49
      %p52 = scmp.ne.s32.totalorder %s35, %s51
      %p53 = scmp.eq.s32.totalorder %s27, 0
      %p54 = por %p52, %p53
      %s56 = sadd.s32 %s55, 1
      %p59 = scmp.eq.s32.totalorder %s21, 1
      %p60 = scmp.ne.s32.totalorder %s55, %s57
      %p61 = scmp.eq.s32.totalorder %s21, 0
      %p62 = por %p60, %p61
      %p63 = scmp.ne.s32.totalorder %s55, %s57
      %p64 = scmp.eq.s32.totalorder %s26, 1
      %p65 = por %p63, %p64
      %p66 = scmp.ne.s32.totalorder %s57, %s58
      %p67 = scmp.eq.s32.totalorder %s26, 0
      %p68 = por %p66, %p67
      %p69 = scmp.ne.s32.totalorder %s57, %s58
      %p70 = scmp.eq.s32.totalorder %s27, 1
      %p71 = por %p69, %p70
      %p73 = scmp.ne.s32.totalorder %s58, %s72
      %p74 = scmp.eq.s32.totalorder %s27, 0
      %p75 = por %p73, %p74
      %s77 = sadd.s32 %s76, 1
      %p80 = scmp.eq.s32.totalorder %s21, 1
      %p81 = scmp.ne.s32.totalorder %s76, %s78
      %p82 = scmp.eq.s32.totalorder %s21, 0
      %p83 = por %p81, %p82
      %p84 = scmp.ne.s32.totalorder %s76, %s78
      %p85 = scmp.eq.s32.totalorder %s26, 1
      %p86 = por %p84, %p85
      %p87 = scmp.ne.s32.totalorder %s78, %s79
      %p88 = scmp.eq.s32.totalorder %s26, 0
      %p89 = por %p87, %p88
      %p90 = scmp.ne.s32.totalorder %s78, %s79
      %p91 = scmp.eq.s32.totalorder %s27, 1
      %p92 = por %p90, %p91
      %p94 = scmp.ne.s32.totalorder %s79, %s93
      %p95 = scmp.eq.s32.totalorder %s27, 0
      %p96 = por %p94, %p95
      %s98 = sadd.s32 %s97, 1
      %p101 = scmp.eq.s32.totalorder %s21, 1
      %p102 = scmp.ne.s32.totalorder %s97, %s99
      %p103 = scmp.eq.s32.totalorder %s21, 0
      %p104 = por %p102, %p103
      %p105 = scmp.ne.s32.totalorder %s97, %s99
      %p106 = scmp.eq.s32.totalorder %s26, 1
      %p107 = por %p105, %p106
      %p108 = scmp.ne.s32.totalorder %s99, %s100
      %p109 = scmp.eq.s32.totalorder %s26, 0
      %p110 = por %p108, %p109
      %p111 = scmp.ne.s32.totalorder %s99, %s100
      %p112 = scmp.eq.s32.totalorder %s27, 1
      %p113 = por %p111, %p112
      %p115 = scmp.ne.s32.totalorder %s100, %s114
      %p116 = scmp.eq.s32.totalorder %s27, 0
      %p117 = por %p115, %p116
      %s119 = sadd.s32 %s118, 1
      %p122 = scmp.eq.s32.totalorder %s21, 1
      %p123 = scmp.ne.s32.totalorder %s118, %s120
      %p124 = scmp.eq.s32.totalorder %s21, 0
      %p125 = por %p123, %p124
      %p126 = scmp.ne.s32.totalorder %s118, %s120
      %p127 = scmp.eq.s32.totalorder %s26, 1
      %p128 = por %p126, %p127
      %p129 = scmp.ne.s32.totalorder %s120, %s121
      %p130 = scmp.eq.s32.totalorder %s26, 0
      %p131 = por %p129, %p130
      %p132 = scmp.ne.s32.totalorder %s120, %s121
      %p133 = scmp.eq.s32.totalorder %s27, 1
      %p134 = por %p132, %p133
      %p136 = scmp.ne.s32.totalorder %s121, %s135
      %p137 = scmp.eq.s32.totalorder %s27, 0
      %p138 = por %p136, %p137
      %s140 = sadd.s32 %s139, 1
      %p143 = scmp.eq.s32.totalorder %s21, 1
      %p144 = scmp.ne.s32.totalorder %s139, %s141
      %p145 = scmp.eq.s32.totalorder %s21, 0
      %p146 = por %p144, %p145
      %p147 = scmp.ne.s32.totalorder %s139, %s141
      %p148 = scmp.eq.s32.totalorder %s26, 1
      %p149 = por %p147, %p148
      %p150 = scmp.ne.s32.totalorder %s141, %s142
      %p151 = scmp.eq.s32.totalorder %s26, 0
      %p152 = por %p150, %p151
      %p153 = scmp.ne.s32.totalorder %s141, %s142
      %p154 = scmp.eq.s32.totalorder %s27, 1
      %p155 = por %p153, %p154
      %p157 = scmp.ne.s32.totalorder %s142, %s156
      %p158 = scmp.eq.s32.totalorder %s27, 0
      %p159 = por %p157, %p158
      %s161 = sadd.s32 %s160, 1
      %p164 = scmp.eq.s32.totalorder %s21, 1
      %p165 = scmp.ne.s32.totalorder %s160, %s162
      %p166 = scmp.eq.s32.totalorder %s21, 0
      %p167 = por %p165, %p166
      %p168 = scmp.ne.s32.totalorder %s160, %s162
      %p169 = scmp.eq.s32.totalorder %s26, 1
      %p170 = por %p168, %p169
      %p171 = scmp.ne.s32.totalorder %s162, %s163
      %p172 = scmp.eq.s32.totalorder %s26, 0
      %p173 = por %p171, %p172
      %p174 = scmp.ne.s32.totalorder %s162, %s163
      %p175 = scmp.eq.s32.totalorder %s27, 1
      %p176 = por %p174, %p175
      %p178 = scmp.ne.s32.totalorder %s163, %s177
      %p179 = scmp.eq.s32.totalorder %s27, 0
      %p180 = por %p178, %p179
      %s181 = ssub.s32 %s21, %s28
      %p182 = scmp.eq.s32.totalorder %s181, 0
      %s184 = sadd.s32 %s183, 1
      %s185 = scalar_select %p182, %s183, %s184
      %p188 = pneg %p182
      %p189 = scmp.eq.s32.totalorder %s21, 1
      %p190 = por %p188, %p189
      %p191 = scmp.ne.s32.totalorder %s183, %s186
      %p192 = scmp.eq.s32.totalorder %s21, 0
      %p193 = por %p191, %p192
      %p194 = scmp.ne.s32.totalorder %s183, %s186
      %p195 = scmp.eq.s32.totalorder %s26, 1
      %p196 = por %p194, %p195
      %p197 = scmp.ne.s32.totalorder %s186, %s187
      %p198 = scmp.eq.s32.totalorder %s26, 0
      %p199 = por %p197, %p198
      %p200 = scmp.ne.s32.totalorder %s186, %s187
      %p201 = scmp.eq.s32.totalorder %s27, 1
      %p202 = por %p200, %p201
      %p204 = scmp.ne.s32.totalorder %s187, %s203
      %p205 = scmp.eq.s32.totalorder %s27, 0
      %p206 = por %p204, %p205
      %p207 = scmp.le.s32.totalorder 1, %s21
      %p208 = scmp.lt.s32.totalorder %s21, 3
      %p209 = pnand %p207, %p208
      %p210 = pneg %p209
      // Predicated region
      $region9: #{tpu_custom_call.1} parent=5 // pred_check
        _
      $region10: #{tpu_custom_call.1} parent=5 // pred_check_branch
        %212 = sbr.rel (%p209) target = $region12
      $region11: #{tpu_custom_call.1} parent=5 // pred_region
        %s213 = ssub.s32 %s21, 1
        // Predicated region
        $region13: #{tpu_custom_call.1} parent=11 // pred_check
          %p214 = pneg %p68
        $region14: #{tpu_custom_call.1} parent=11 // pred_check_branch
          %216 = sbr.rel (%p214) target = $region16
        $region15: #{tpu_custom_call.1} parent=11 // pred_region
          %s218 = ssub.s32 256, 256
          %219 = vsyncadd [#allocation6], %s218
          %s220 = sshll.u32 [#allocation5], 4
          %s221 = int_to_ptr.vmem [resolvable:$true] %s220
          %226 = dma.hbm_to_vmem [thread:$0]  %s1, 256, %s221, [#allocation6], 64, 64, 4
        $region16: #{tpu_custom_call.1} parent=11 // pred_fallthru
          _
        // Predicated region
        $region17: #{tpu_custom_call.1} parent=11 // pred_check
          %p227 = pneg %p89
        $region18: #{tpu_custom_call.1} parent=11 // pred_check_branch
          %229 = sbr.rel (%p227) target = $region20
        $region19: #{tpu_custom_call.1} parent=11 // pred_region
          _
        $region20: #{tpu_custom_call.1} parent=11 // pred_fallthru
          _
        // Predicated region
        $region21: #{tpu_custom_call.1} parent=11 // pred_check
          %p230 = pneg %p110
        $region22: #{tpu_custom_call.1} parent=11 // pred_check_branch
          %232 = sbr.rel (%p230) target = $region24
        $region23: #{tpu_custom_call.1} parent=11 // pred_region
          %s234 = ssub.s32 2048, 2048
          %235 = vsyncadd [#allocation6], %s234
          %s236 = sshll.u32 [#allocation7], 4
          %s237 = int_to_ptr.vmem [resolvable:$true] %s236
          %242 = dma.hbm_to_vmem [thread:$0]  %s3, 2048, %s237, [#allocation6], 64, 64, 4
        $region24: #{tpu_custom_call.1} parent=11 // pred_fallthru
          _
        // Predicated region
        $region25: #{tpu_custom_call.1} parent=11 // pred_check
          %p243 = pneg %p131
        $region26: #{tpu_custom_call.1} parent=11 // pred_check_branch
          %245 = sbr.rel (%p243) target = $region28
        $region27: #{tpu_custom_call.1} parent=11 // pred_region
          _
        $region28: #{tpu_custom_call.1} parent=11 // pred_fallthru
          _
        // Predicated region
        $region29: #{tpu_custom_call.1} parent=11 // pred_check
          %p246 = pneg %p152
        $region30: #{tpu_custom_call.1} parent=11 // pred_check_branch
          %248 = sbr.rel (%p246) target = $region32
        $region31: #{tpu_custom_call.1} parent=11 // pred_region
          %s250 = ssub.s32 1024, 1024
          %251 = vsyncadd [#allocation9], %s250
          %s252 = sshll.u32 [#allocation8], 4
          %s253 = int_to_ptr.vmem [resolvable:$true] %s252
          %258 = dma.hbm_to_vmem [thread:$0]  %s5, 1024, %s253, [#allocation9], 64, 64, 4
        $region32: #{tpu_custom_call.1} parent=11 // pred_fallthru
          _
        // Predicated region
        $region33: #{tpu_custom_call.1} parent=11 // pred_check
          %p259 = pneg %p173
        $region34: #{tpu_custom_call.1} parent=11 // pred_check_branch
          %261 = sbr.rel (%p259) target = $region36
        $region35: #{tpu_custom_call.1} parent=11 // pred_region
          _
        $region36: #{tpu_custom_call.1} parent=11 // pred_fallthru
          _
      $region12: #{tpu_custom_call.1} parent=5 // pred_fallthru
        _
      %p262 = scmp.lt.s32.totalorder %s21, 2
      // Predicated region
      $region37: #{tpu_custom_call.1} parent=5 // pred_check
        %p263 = pneg %p262
      $region38: #{tpu_custom_call.1} parent=5 // pred_check_branch
        %265 = sbr.rel (%p263) target = $region40
      $region39: #{tpu_custom_call.1} parent=5 // pred_region
        // Predicated region
        $region41: #{tpu_custom_call.1} parent=39 // pred_check
          %p266 = pneg %p41
        $region42: #{tpu_custom_call.1} parent=39 // pred_check_branch
          %268 = sbr.rel (%p266) target = $region44
        $region43: #{tpu_custom_call.1} parent=39 // pred_region
          %s269 = sand.u32 %s31, 1
          %s270 = scalar_lea.sflag [#allocation3], %s269
          %s271 = sand.u32 %s31, 1
          %s272 = smul.addr %s271, 16
          %s273 = scalar_lea.vmem [#allocation2], %s272
          %s274 = smul.u32 2, %s21
          %s276 = ssub.s32 256, 256
          %277 = vsyncadd %s270, %s276
          %s278 = smul.addr %s274, 128
          %s279 = scalar_lea.hbm %s0, %s278
          %s280 = sshll.u32 %s273, 4
          %s281 = int_to_ptr.vmem [resolvable:$true] %s280
          %286 = dma.hbm_to_vmem [thread:$0]  %s279, 256, %s281, %s270, 128, 128, 8
        $region44: #{tpu_custom_call.1} parent=39 // pred_fallthru
          _
      $region40: #{tpu_custom_call.1} parent=5 // pred_fallthru
        _
      %p287 = scmp.le.s32.totalorder 1, %s21
      %p288 = scmp.lt.s32.totalorder %s21, 3
      %p289 = pnand %p287, %p288
      %p290 = pneg %p289
      // Predicated region
      $region45: #{tpu_custom_call.1} parent=5 // pred_check
        _
      $region46: #{tpu_custom_call.1} parent=5 // pred_check_branch
        %292 = sbr.rel (%p289) target = $region48
      $region47: #{tpu_custom_call.1} parent=5 // pred_region
        %s293 = ssub.s32 %s21, 1
        %s294 = sand.u32 %s34, 1
        %s295 = scalar_lea.sflag [#allocation3], %s294
        %s296 = sand.u32 %s34, 1
        %s297 = smul.addr %s296, 16
        %s298 = scalar_lea.vmem [#allocation2], %s297
        // Predicated region
        $region49: #{tpu_custom_call.1} parent=47 // pred_check
          %p299 = pneg %p47
        $region50: #{tpu_custom_call.1} parent=47 // pred_check_branch
          %301 = sbr.rel (%p299) target = $region52
        $region51: #{tpu_custom_call.1} parent=47 // pred_region
          %302 = dma.done %s295, 256
        $region52: #{tpu_custom_call.1} parent=47 // pred_fallthru
          _
        // Predicated region
        $region53: #{tpu_custom_call.1} parent=47 // pred_check
          %p303 = pneg %p68
        $region54: #{tpu_custom_call.1} parent=47 // pred_check_branch
          %305 = sbr.rel (%p303) target = $region56
        $region55: #{tpu_custom_call.1} parent=47 // pred_region
          %306 = dma.done [#allocation6], 256
        $region56: #{tpu_custom_call.1} parent=47 // pred_fallthru
          _
        // Predicated region
        $region57: #{tpu_custom_call.1} parent=47 // pred_check
          %p307 = pneg %p110
        $region58: #{tpu_custom_call.1} parent=47 // pred_check_branch
          %309 = sbr.rel (%p307) target = $region60
        $region59: #{tpu_custom_call.1} parent=47 // pred_region
          %310 = dma.done [#allocation6], 2048
        $region60: #{tpu_custom_call.1} parent=47 // pred_fallthru
          _
        // Predicated region
        $region61: #{tpu_custom_call.1} parent=47 // pred_check
          %p311 = pneg %p152
        $region62: #{tpu_custom_call.1} parent=47 // pred_check_branch
          %313 = sbr.rel (%p311) target = $region64
        $region63: #{tpu_custom_call.1} parent=47 // pred_region
          %314 = dma.done [#allocation9], 1024
        $region64: #{tpu_custom_call.1} parent=47 // pred_fallthru
          _
        %s315 = sand.u32 %s34, 1
        %s316 = scalar_lea.sflag [#allocation3], %s315
        %s317 = sand.u32 %s34, 1
        %s318 = smul.addr %s317, 16
        %s319 = scalar_lea.vmem [#allocation2], %s318
        %p320 = pneg %p47
        %p321 = pneg %p44
        %p322 = pneg %p68
        %p323 = pneg %p65
        %p324 = pneg %p89
        %p325 = pneg %p86
        %p326 = pneg %p110
        %p327 = pneg %p107
        %p328 = pneg %p131
        %p329 = pneg %p128
        %p330 = pneg %p152
        %p331 = pneg %p149
        %p332 = pneg %p173
        %p333 = pneg %p170
        %p334 = pneg %p199
        %p335 = pneg %p196
        %s336 = sand.u32 %s186, 1
        %s337 = scalar_lea.sflag [#allocation4], %s336
        %s338 = sand.u32 %s186, 1
        %s339 = smul.addr %s338, 16
        %s340 = scalar_lea.vmem [#allocation10], %s339
        %s341 = smul.u32 2, %s26
        %s342 = smul.u32 2, %s26
        %v344 = vld [vmem:[#allocation5] sm:$0xf]
        %v345 = vld [vmem:[#allocation5 + $0x4] sm:$0xf]
        %v346 = vld [vmem:[#allocation5 + $0x8] sm:$0xf]
        %v347 = vld [vmem:[#allocation5 + $0xc] sm:$0xf]
        %v348 = vld [vmem:[%s298] sm:$0xff]
        %v349 = vld [vmem:[%s298 + $0x8] sm:$0xff]
        %v350 = vpack.c.bf16 %v349, %v348
        %v351 = vld [vmem:[%s2] sm:$0x1]
        %v353 = vlaneseq
        %v354 = vshrl.u32 %v353, 7
        %v355 = vsub.s32 0, %v354
        %v356 = vrot.slane %v351, %v355
        %v362 = vunpack.c.l.b16 %v344
        %v363 = vunpack.c.l.b16 %v345
        %v364 = vunpack.c.l.b16 %v346
        %v365 = vunpack.c.l.b16 %v347
        %v366 = vpack.c.b16 %v363, %v362
        %v367 = vpack.c.b16 %v365, %v364
        %vm370 = vcmask 261120
        %v372 = vsel %vm370, %v350, 0
        %374 = vmatprep.subr.bf16.mxu0 0
        %375 = vmatpush1.bf16.msra.mxu0 %v366
        %376 = vmatprep.subr.bf16.mxu0 0
        %377 = vmatpush1.bf16.msra.mxu0 %v367
        %378 = vmatprep.subr.bf16.mxu0 0
        %379 = vmatpush1.bf16.msra.mxu0 0
        %380 = vmatprep.subr.bf16.mxu0 0
        %381 = vmatpush1.bf16.msra.mxu0 0
        %382 = vmatprep.subr.bf16.mxu0 0
        %383 = vmatpush1.bf16.msra.mxu0 0
        %384 = vmatprep.subr.bf16.mxu0 0
        %385 = vmatpush1.bf16.msra.mxu0 0
        %386 = vmatprep.subr.bf16.mxu0 0
        %387 = vmatpush1.bf16.msra.mxu0 0
        %388 = vmatprep.subr.bf16.mxu0 0
        %389 = vmatpush1.bf16.msra.mxu0 0
        %390 = vmatprep.subr.bf16.mxu0 0
        %391 = vmatpush1.bf16.msra.mxu0 0
        %392 = vmatprep.subr.bf16.mxu0 0
        %393 = vmatpush1.bf16.msra.mxu0 0
        %394 = vmatprep.subr.bf16.mxu0 0
        %395 = vmatpush1.bf16.msra.mxu0 0
        %396 = vmatprep.subr.bf16.mxu0 0
        %397 = vmatpush1.bf16.msra.mxu0 0
        %398 = vmatprep.subr.bf16.mxu0 0
        %399 = vmatpush1.bf16.msra.mxu0 0
        %400 = vmatprep.subr.bf16.mxu0 0
        %401 = vmatpush1.bf16.msra.mxu0 0
        %402 = vmatprep.subr.bf16.mxu0 0
        %403 = vmatpush1.bf16.msra.mxu0 0
        %404 = vmatprep.subr.bf16.mxu0 0
        %405 = vmatpush1.bf16.msra.mxu0 0
        %406 = vmatprep.mubr.bf16.mxu0 0
        %407 = vmatmul.mubr.bf16.gmra.mrb[0].mxu0 %v372
        %v408 = vpop.f32.mrb[0].mxu0
        %v409 = vadd.f32 %v356, %v408
        %v410 = vpop.f32.mrb[0].mxu0
        %v411 = vpop.f32.mrb[0].mxu0
        %v412 = vadd.f32 %v356, %v411
        %v413 = vpop.f32.mrb[0].mxu0
        %414 = vdwg.mxu0
        %v415 = vmax.f32 %v409, 0.0
        %v416 = vmax.f32 %v412, 0.0
        %v417 = vld [vmem:[#allocation7] sm:$0xf]
        %v418 = vld [vmem:[#allocation7 + $0x4] sm:$0xf]
        %v419 = vld [vmem:[#allocation7 + $0x8] sm:$0xf]
        %v420 = vld [vmem:[#allocation7 + $0xc] sm:$0xf]
        %v421 = vld [vmem:[#allocation7 + $0x10] sm:$0xf]
        %v422 = vld [vmem:[#allocation7 + $0x14] sm:$0xf]
        %v423 = vld [vmem:[#allocation7 + $0x18] sm:$0xf]
        %v424 = vld [vmem:[#allocation7 + $0x1c] sm:$0xf]
        %v425 = vld [vmem:[#allocation7 + $0x20] sm:$0xf]
        %v426 = vld [vmem:[#allocation7 + $0x24] sm:$0xf]
        %v427 = vld [vmem:[#allocation7 + $0x28] sm:$0xf]
        %v428 = vld [vmem:[#allocation7 + $0x2c] sm:$0xf]
        %v429 = vld [vmem:[#allocation7 + $0x30] sm:$0xf]
        %v430 = vld [vmem:[#allocation7 + $0x34] sm:$0xf]
        %v431 = vld [vmem:[#allocation7 + $0x38] sm:$0xf]
        %v432 = vld [vmem:[#allocation7 + $0x3c] sm:$0xf]
        %v433 = vpack.c.bf16 %v416, %v415
        %v434 = vld [vmem:[%s4] sm:$0x1]
        %v436 = vlaneseq
        %v437 = vshrl.u32 %v436, 7
        %v438 = vsub.s32 0, %v437
        %v439 = vrot.slane %v434, %v438
        %v457 = vunpack.c.l.b16 %v417
        %v458 = vunpack.c.l.b16 %v418
        %v459 = vunpack.c.l.b16 %v419
        %v460 = vunpack.c.l.b16 %v420
        %v461 = vunpack.c.l.b16 %v421
        %v462 = vunpack.c.l.b16 %v422
        %v463 = vunpack.c.l.b16 %v423
        %v464 = vunpack.c.l.b16 %v424
        %v465 = vunpack.c.l.b16 %v425
        %v466 = vunpack.c.l.b16 %v426
        %v467 = vunpack.c.l.b16 %v427
        %v468 = vunpack.c.l.b16 %v428
        %v469 = vunpack.c.l.b16 %v429
        %v470 = vunpack.c.l.b16 %v430
        %v471 = vunpack.c.l.b16 %v431
        %v472 = vunpack.c.l.b16 %v432
        %v473 = vpack.c.b16 %v458, %v457
        %v474 = vpack.c.b16 %v460, %v459
        %v475 = vpack.c.b16 %v462, %v461
        %v476 = vpack.c.b16 %v464, %v463
        %v477 = vpack.c.b16 %v466, %v465
        %v478 = vpack.c.b16 %v468, %v467
        %v479 = vpack.c.b16 %v470, %v469
        %v480 = vpack.c.b16 %v472, %v471
        %489 = vmatprep.subr.bf16.mxu0 0
        %490 = vmatpush1.bf16.msra.mxu0 %v473
        %491 = vmatprep.subr.bf16.mxu0 0
        %492 = vmatpush1.bf16.msra.mxu0 %v474
        %493 = vmatprep.subr.bf16.mxu0 0
        %494 = vmatpush1.bf16.msra.mxu0 %v475
        %495 = vmatprep.subr.bf16.mxu0 0
        %496 = vmatpush1.bf16.msra.mxu0 %v476
        %497 = vmatprep.subr.bf16.mxu0 0
        %498 = vmatpush1.bf16.msra.mxu0 %v477
        %499 = vmatprep.subr.bf16.mxu0 0
        %500 = vmatpush1.bf16.msra.mxu0 %v478
        %501 = vmatprep.subr.bf16.mxu0 0
        %502 = vmatpush1.bf16.msra.mxu0 %v479
        %503 = vmatprep.subr.bf16.mxu0 0
        %504 = vmatpush1.bf16.msra.mxu0 %v480
        %505 = vmatprep.subr.bf16.mxu0 0
        %506 = vmatpush1.bf16.msra.mxu0 0
        %507 = vmatprep.subr.bf16.mxu0 0
        %508 = vmatpush1.bf16.msra.mxu0 0
        %509 = vmatprep.subr.bf16.mxu0 0
        %510 = vmatpush1.bf16.msra.mxu0 0
        %511 = vmatprep.subr.bf16.mxu0 0
        %512 = vmatpush1.bf16.msra.mxu0 0
        %513 = vmatprep.subr.bf16.mxu0 0
        %514 = vmatpush1.bf16.msra.mxu0 0
        %515 = vmatprep.subr.bf16.mxu0 0
        %516 = vmatpush1.bf16.msra.mxu0 0
        %517 = vmatprep.subr.bf16.mxu0 0
        %518 = vmatpush1.bf16.msra.mxu0 0
        %519 = vmatprep.subr.bf16.mxu0 0
        %520 = vmatpush1.bf16.msra.mxu0 0
        %521 = vmatprep.mubr.bf16.mxu0 0
        %522 = vmatmul.mubr.bf16.gmra.mrb[0].mxu0 %v433
        %v523 = vpop.f32.mrb[0].mxu0
        %v524 = vadd.f32 %v439, %v523
        %v525 = vpop.f32.mrb[0].mxu0
        %v526 = vpop.f32.mrb[0].mxu0
        %v527 = vadd.f32 %v439, %v526
        %v528 = vpop.f32.mrb[0].mxu0
        %529 = vdwg.mxu0
        %v530 = vmax.f32 %v524, 0.0
        %v531 = vmax.f32 %v527, 0.0
        %s532 = scalar_lea.vmem [#allocation7], 64
        %v533 = vld [vmem:[%s532] sm:$0xf]
        %v534 = vld [vmem:[%s532 + $0x4] sm:$0xf]
        %v535 = vld [vmem:[%s532 + $0x8] sm:$0xf]
        %v536 = vld [vmem:[%s532 + $0xc] sm:$0xf]
        %v537 = vld [vmem:[%s532 + $0x10] sm:$0xf]
        %v538 = vld [vmem:[%s532 + $0x14] sm:$0xf]
        %v539 = vld [vmem:[%s532 + $0x18] sm:$0xf]
        %v540 = vld [vmem:[%s532 + $0x1c] sm:$0xf]
        %v541 = vld [vmem:[%s532 + $0x20] sm:$0xf]
        %v542 = vld [vmem:[%s532 + $0x24] sm:$0xf]
        %v543 = vld [vmem:[%s532 + $0x28] sm:$0xf]
        %v544 = vld [vmem:[%s532 + $0x2c] sm:$0xf]
        %v545 = vld [vmem:[%s532 + $0x30] sm:$0xf]
        %v546 = vld [vmem:[%s532 + $0x34] sm:$0xf]
        %v547 = vld [vmem:[%s532 + $0x38] sm:$0xf]
        %v548 = vld [vmem:[%s532 + $0x3c] sm:$0xf]
        %v549 = vpack.c.bf16 %v531, %v530
        %s550 = scalar_lea.vmem %s4, 1
        %v551 = vld [vmem:[%s550] sm:$0x1]
        %v553 = vlaneseq
        %v554 = vshrl.u32 %v553, 7
        %v555 = vsub.s32 0, %v554
        %v556 = vrot.slane %v551, %v555
        %v574 = vunpack.c.l.b16 %v533
        %v575 = vunpack.c.l.b16 %v534
        %v576 = vunpack.c.l.b16 %v535
        %v577 = vunpack.c.l.b16 %v536
        %v578 = vunpack.c.l.b16 %v537
        %v579 = vunpack.c.l.b16 %v538
        %v580 = vunpack.c.l.b16 %v539
        %v581 = vunpack.c.l.b16 %v540
        %v582 = vunpack.c.l.b16 %v541
        %v583 = vunpack.c.l.b16 %v542
        %v584 = vunpack.c.l.b16 %v543
        %v585 = vunpack.c.l.b16 %v544
        %v586 = vunpack.c.l.b16 %v545
        %v587 = vunpack.c.l.b16 %v546
        %v588 = vunpack.c.l.b16 %v547
        %v589 = vunpack.c.l.b16 %v548
        %v590 = vpack.c.b16 %v575, %v574
        %v591 = vpack.c.b16 %v577, %v576
        %v592 = vpack.c.b16 %v579, %v578
        %v593 = vpack.c.b16 %v581, %v580
        %v594 = vpack.c.b16 %v583, %v582
        %v595 = vpack.c.b16 %v585, %v584
        %v596 = vpack.c.b16 %v587, %v586
        %v597 = vpack.c.b16 %v589, %v588
        %606 = vmatprep.subr.bf16.mxu0 0
        %607 = vmatpush1.bf16.msra.mxu0 %v590
        %608 = vmatprep.subr.bf16.mxu0 0
        %609 = vmatpush1.bf16.msra.mxu0 %v591
        %610 = vmatprep.subr.bf16.mxu0 0
        %611 = vmatpush1.bf16.msra.mxu0 %v592
        %612 = vmatprep.subr.bf16.mxu0 0
        %613 = vmatpush1.bf16.msra.mxu0 %v593
        %614 = vmatprep.subr.bf16.mxu0 0
        %615 = vmatpush1.bf16.msra.mxu0 %v594
        %616 = vmatprep.subr.bf16.mxu0 0
        %617 = vmatpush1.bf16.msra.mxu0 %v595
        %618 = vmatprep.subr.bf16.mxu0 0
        %619 = vmatpush1.bf16.msra.mxu0 %v596
        %620 = vmatprep.subr.bf16.mxu0 0
        %621 = vmatpush1.bf16.msra.mxu0 %v597
        %622 = vmatprep.subr.bf16.mxu0 0
        %623 = vmatpush1.bf16.msra.mxu0 0
        %624 = vmatprep.subr.bf16.mxu0 0
        %625 = vmatpush1.bf16.msra.mxu0 0
        %626 = vmatprep.subr.bf16.mxu0 0
        %627 = vmatpush1.bf16.msra.mxu0 0
        %628 = vmatprep.subr.bf16.mxu0 0
        %629 = vmatpush1.bf16.msra.mxu0 0
        %630 = vmatprep.subr.bf16.mxu0 0
        %631 = vmatpush1.bf16.msra.mxu0 0
        %632 = vmatprep.subr.bf16.mxu0 0
        %633 = vmatpush1.bf16.msra.mxu0 0
        %634 = vmatprep.subr.bf16.mxu0 0
        %635 = vmatpush1.bf16.msra.mxu0 0
        %636 = vmatprep.subr.bf16.mxu0 0
        %637 = vmatpush1.bf16.msra.mxu0 0
        %638 = vmatprep.mubr.bf16.mxu0 0
        %639 = vmatmul.mubr.bf16.gmra.mrb[0].mxu0 %v549
        %v640 = vpop.f32.mrb[0].mxu0
        %v641 = vadd.f32 %v556, %v640
        %v642 = vpop.f32.mrb[0].mxu0
        %v643 = vpop.f32.mrb[0].mxu0
        %v644 = vadd.f32 %v556, %v643
        %v645 = vpop.f32.mrb[0].mxu0
        %646 = vdwg.mxu0
        %v647 = vmax.f32 %v641, 0.0
        %v648 = vmax.f32 %v644, 0.0
        %v649 = vld [vmem:[#allocation8] sm:$0xf]
        %v650 = vld [vmem:[#allocation8 + $0x4] sm:$0xf]
        %v651 = vld [vmem:[#allocation8 + $0x8] sm:$0xf]
        %v652 = vld [vmem:[#allocation8 + $0xc] sm:$0xf]
        %v653 = vld [vmem:[#allocation8 + $0x10] sm:$0xf]
        %v654 = vld [vmem:[#allocation8 + $0x14] sm:$0xf]
        %v655 = vld [vmem:[#allocation8 + $0x18] sm:$0xf]
        %v656 = vld [vmem:[#allocation8 + $0x1c] sm:$0xf]
        %v657 = vld [vmem:[#allocation8 + $0x20] sm:$0xf]
        %v658 = vld [vmem:[#allocation8 + $0x24] sm:$0xf]
        %v659 = vld [vmem:[#allocation8 + $0x28] sm:$0xf]
        %v660 = vld [vmem:[#allocation8 + $0x2c] sm:$0xf]
        %v661 = vld [vmem:[#allocation8 + $0x30] sm:$0xf]
        %v662 = vld [vmem:[#allocation8 + $0x34] sm:$0xf]
        %v663 = vld [vmem:[#allocation8 + $0x38] sm:$0xf]
        %v664 = vld [vmem:[#allocation8 + $0x3c] sm:$0xf]
        %v665 = vpack.c.bf16 %v648, %v647
        %v666 = vld [vmem:[%s6] sm:$0x1]
        %v668 = vlaneseq
        %v669 = vshrl.u32 %v668, 7
        %v670 = vsub.s32 0, %v669
        %v671 = vrot.slane %v666, %v670
        %v689 = vunpack.c.l.b16 %v649
        %v690 = vunpack.c.l.b16 %v650
        %v691 = vunpack.c.l.b16 %v651
        %v692 = vunpack.c.l.b16 %v652
        %v693 = vunpack.c.l.b16 %v653
        %v694 = vunpack.c.l.b16 %v654
        %v695 = vunpack.c.l.b16 %v655
        %v696 = vunpack.c.l.b16 %v656
        %v697 = vunpack.c.l.b16 %v657
        %v698 = vunpack.c.l.b16 %v658
        %v699 = vunpack.c.l.b16 %v659
        %v700 = vunpack.c.l.b16 %v660
        %v701 = vunpack.c.l.b16 %v661
        %v702 = vunpack.c.l.b16 %v662
        %v703 = vunpack.c.l.b16 %v663
        %v704 = vunpack.c.l.b16 %v664
        %v705 = vpack.c.b16 %v690, %v689
        %v706 = vpack.c.b16 %v692, %v691
        %v707 = vpack.c.b16 %v694, %v693
        %v708 = vpack.c.b16 %v696, %v695
        %v709 = vpack.c.b16 %v698, %v697
        %v710 = vpack.c.b16 %v700, %v699
        %v711 = vpack.c.b16 %v702, %v701
        %v712 = vpack.c.b16 %v704, %v703
        %721 = vmatprep.subr.bf16.mxu0 0
        %722 = vmatpush1.bf16.msra.mxu0 %v705
        %723 = vmatprep.subr.bf16.mxu0 0
        %724 = vmatpush1.bf16.msra.mxu0 %v706
        %725 = vmatprep.subr.bf16.mxu0 0
        %726 = vmatpush1.bf16.msra.mxu0 %v707
        %727 = vmatprep.subr.bf16.mxu0 0
        %728 = vmatpush1.bf16.msra.mxu0 %v708
        %729 = vmatprep.subr.bf16.mxu0 0
        %730 = vmatpush1.bf16.msra.mxu0 %v709
        %731 = vmatprep.subr.bf16.mxu0 0
        %732 = vmatpush1.bf16.msra.mxu0 %v710
        %733 = vmatprep.subr.bf16.mxu0 0
        %734 = vmatpush1.bf16.msra.mxu0 %v711
        %735 = vmatprep.subr.bf16.mxu0 0
        %736 = vmatpush1.bf16.msra.mxu0 %v712
        %737 = vmatprep.subr.bf16.mxu0 0
        %738 = vmatpush1.bf16.msra.mxu0 0
        %739 = vmatprep.subr.bf16.mxu0 0
        %740 = vmatpush1.bf16.msra.mxu0 0
        %741 = vmatprep.subr.bf16.mxu0 0
        %742 = vmatpush1.bf16.msra.mxu0 0
        %743 = vmatprep.subr.bf16.mxu0 0
        %744 = vmatpush1.bf16.msra.mxu0 0
        %745 = vmatprep.subr.bf16.mxu0 0
        %746 = vmatpush1.bf16.msra.mxu0 0
        %747 = vmatprep.subr.bf16.mxu0 0
        %748 = vmatpush1.bf16.msra.mxu0 0
        %749 = vmatprep.subr.bf16.mxu0 0
        %750 = vmatpush1.bf16.msra.mxu0 0
        %751 = vmatprep.subr.bf16.mxu0 0
        %752 = vmatpush1.bf16.msra.mxu0 0
        %753 = vmatprep.mubr.bf16.mxu0 0
        %754 = vmatmul.mubr.bf16.gmra.mrb[0].mxu0 %v665
        %v755 = vpop.f32.mrb[0].mxu0
        %v756 = vadd.f32 %v671, %v755
        %v757 = vpop.f32.mrb[0].mxu0
        %v758 = vpop.f32.mrb[0].mxu0
        %v759 = vadd.f32 %v671, %v758
        %v760 = vpop.f32.mrb[0].mxu0
        %761 = vdwg.mxu0
        %v762 = vtanh.pop %v756
        %v763 = vtanh.pop %v759
        %764 = vst [vmem:[%s340] sm:$0xff] %v762
        %765 = vst [vmem:[%s340 + $0x8] sm:$0xff] %v763
        %s766 = sand.u32 %s186, 1
        %s767 = scalar_lea.sflag [#allocation4], %s766
        %s768 = sand.u32 %s186, 1
        %s769 = smul.addr %s768, 16
        %s770 = scalar_lea.vmem [#allocation10], %s769
        // Predicated region
        $region65: #{tpu_custom_call.1} parent=47 // pred_check
          %p771 = pneg %p196
        $region66: #{tpu_custom_call.1} parent=47 // pred_check_branch
          %773 = sbr.rel (%p771) target = $region68
        $region67: #{tpu_custom_call.1} parent=47 // pred_region
          %s774 = smul.u32 2, %s26
          %s776 = ssub.s32 256, 256
          %777 = vsyncadd %s767, %s776
          %s778 = smul.addr %s774, 128
          %s779 = scalar_lea.hbm %s7, %s778
          %s780 = sshll.u32 %s770, 4
          %s781 = int_to_ptr.vmem [resolvable:$true] %s780
          %786 = dma.vmem_to_hbm [thread:$0]  %s781, 256, %s779, %s767, 128, 128, 8
        $region68: #{tpu_custom_call.1} parent=47 // pred_fallthru
          _
      $region48: #{tpu_custom_call.1} parent=5 // pred_fallthru
        _
      %p787 = scmp.le.s32.totalorder 2, %s21
      // Predicated region
      $region69: #{tpu_custom_call.1} parent=5 // pred_check
        %p788 = pneg %p787
      $region70: #{tpu_custom_call.1} parent=5 // pred_check_branch
        %790 = sbr.rel (%p788) target = $region72
      $region71: #{tpu_custom_call.1} parent=5 // pred_region
        %s791 = ssub.s32 %s21, 2
        // Predicated region
        $region73: #{tpu_custom_call.1} parent=71 // pred_check
          %p792 = pneg %p202
        $region74: #{tpu_custom_call.1} parent=71 // pred_check_branch
          %794 = sbr.rel (%p792) target = $region76
        $region75: #{tpu_custom_call.1} parent=71 // pred_region
          %s795 = sand.u32 %s187, 1
          %s796 = scalar_lea.sflag [#allocation4], %s795
          %s797 = sand.u32 %s187, 1
          %s798 = smul.addr %s797, 16
          %s799 = scalar_lea.vmem [#allocation10], %s798
          %800 = dma.done %s796, 256
        $region76: #{tpu_custom_call.1} parent=71 // pred_fallthru
          _
      $region72: #{tpu_custom_call.1} parent=5 // pred_fallthru
        _
    $region6: #{tpu_custom_call.1} parent=1 // loop_footer
      %s25 = sadd.s32 1, %s21
    $region7: #{tpu_custom_call.1} parent=1 // loop_footer_branch
      %20 = sbr.rel target = $region3
    $region8: #{tpu_custom_call.1} parent=1 // loop_exit
      _
    %801 = vsyncpa [#allocation3], 1
    %s802 = scalar_lea.sflag [#allocation3], 1
    %803 = vsyncpa %s802, 1
    %804 = vsyncpa [#allocation6], 1
    %805 = vsyncpa [#allocation9], 1
    %806 = vsyncpa [#allocation4], 1
    %s807 = scalar_lea.sflag [#allocation4], 1
    %808 = vsyncpa %s807, 1

// kernel: tpu_custom_call.1
$region0: #{tpu_custom_call.1}
  #allocation0 [shape = 'u32[]', space=smem, size = 0x4, offset = 0x4, fixed_abs, tag = 'smem constant byte address 0x4 - core index']
  #allocation1 [shape = 'u32[144,128]{1,0:T(1,128)}', space=vmem, size = 0x12000, scoped, tag = 'internal scratch']
  %s0 = inlined_call_operand.hbm [shape: f32[32,32], index: 0, kind: input, shape index: {}]
  %s1 = inlined_call_operand.hbm [shape: bf16[32,128], index: 1, kind: input, shape index: {}]
  %s2 = inlined_call_operand.vmem [shape: f32[1,128], index: 2, kind: input, shape index: {}]
  %s3 = inlined_call_operand.hbm [shape: bf16[2,128,128], index: 3, kind: input, shape index: {}]
  %s4 = inlined_call_operand.vmem [shape: f32[2,1,128], index: 4, kind: input, shape index: {}]
  %s5 = inlined_call_operand.hbm [shape: bf16[128,128], index: 5, kind: input, shape index: {}]
  %s6 = inlined_call_operand.vmem [shape: f32[1,128], index: 6, kind: input, shape index: {}]
  %s7 = inlined_call_operand.hbm [shape: f32[32,128], index: 7, kind: output, shape index: {}]
  %s8 = sld [smem:[#allocation0]]
  $region77: #{tpu_custom_call.1} parent=0
    _
  %s10 = ssub.s32 1, %s8
  %s11 = scalar_select 0, %s10, %s8
  $region1: #{tpu_custom_call.1} parent=0
    #allocation2 [shape = 'u8[16384]{0}', space=vmem, size = 0x4000, scoped, tag = 'input window, operand 0']
    #allocation3 [shape = 's32[2]{0}', space=sflag, size = 0x8, scoped, tag = 'scoped memory for tpu_custom_call.1']
    #allocation4 [shape = 's32[2]{0}', space=sflag, size = 0x8, scoped, tag = 'scoped memory for tpu_custom_call.1']
    #allocation5 [shape = 'u8[8192]{0}', space=vmem, size = 0x2000, scoped, tag = 'input window, operand 1, single buffered']
    #allocation6 [shape = 's32[1]{0}', space=sflag, size = 0x4, scoped, tag = 'scoped memory for tpu_custom_call.1']
    #allocation7 [shape = 'u8[65536]{0}', space=vmem, size = 0x10000, scoped, tag = 'input window, operand 3, single buffered']
    #allocation8 [shape = 'u8[32768]{0}', space=vmem, size = 0x8000, scoped, tag = 'input window, operand 5, single buffered']
    #allocation9 [shape = 's32[1]{0}', space=sflag, size = 0x4, scoped, tag = 'scoped memory for tpu_custom_call.1']
    #allocation10 [shape = 'u8[16384]{0}', space=vmem, size = 0x4000, scoped, tag = 'output window, operand 0']
    %12 = vsyncpa [#allocation3], 0
    %s13 = scalar_lea.sflag [#allocation3], 1
    %14 = vsyncpa %s13, 0
    %15 = vsyncpa [#allocation6], 0
    %16 = vsyncpa [#allocation9], 0
    %17 = vsyncpa [#allocation4], 0
    %s18 = scalar_lea.sflag [#allocation4], 1
    %19 = vsyncpa %s18, 0
    loop: start=0, step=1, limit=4
    $region2: #{tpu_custom_call.1} parent=1 // loop_pre_header
      _
    $region3: #{tpu_custom_call.1} parent=1 // loop_header
      %s21 = sphi 0, %s25
      %p22 = scmp.ge.s32.totalorder %s21, 4
      %s31 = sphi 0, %s33
      %s34 = sphi 0, %s31
      %s35 = sphi 0, %s34
      %s51 = sphi 0, %s35
      %s55 = sphi 0, %s55
      %s57 = sphi 0, %s55
      %s58 = sphi 0, %s57
      %s72 = sphi 0, %s58
      %s76 = sphi 0, %s76
      %s78 = sphi 0, %s76
      %s79 = sphi 0, %s78
      %s93 = sphi 0, %s79
      %s97 = sphi 0, %s97
      %s99 = sphi 0, %s97
      %s100 = sphi 0, %s99
      %s114 = sphi 0, %s100
      %s118 = sphi 0, %s118
      %s120 = sphi 0, %s118
      %s121 = sphi 0, %s120
      %s135 = sphi 0, %s121
      %s139 = sphi 0, %s139
      %s141 = sphi 0, %s139
      %s142 = sphi 0, %s141
      %s156 = sphi 0, %s142
      %s160 = sphi 0, %s160
      %s162 = sphi 0, %s160
      %s163 = sphi 0, %s162
      %s177 = sphi 0, %s163
      %s183 = sphi 0, %s185
      %s186 = sphi 0, %s183
      %s187 = sphi 0, %s186
      %s203 = sphi 0, %s187
    $region4: #{tpu_custom_call.1} parent=1 // loop_header_branch
      %24 = sbr.rel (%p22) target = $region8
    $region5: #{tpu_custom_call.1} parent=1 // loop_body
      %s26 = ssub.s32 %s21, 1
      %s27 = ssub.s32 %s21, 2
      %s28 = sadd.s32 %s21, 1
      %s29 = ssub.s32 %s21, %s28
      %p30 = scmp.eq.s32.totalorder %s29, 0
      %s32 = sadd.s32 %s31, 1
      %s33 = scalar_select %p30, %s31, %s32
      %p36 = pneg %p30
      %p37 = scmp.eq.s32.totalorder %s21, 1
      %p38 = por %p36, %p37
      %p39 = scmp.ne.s32.totalorder %s31, %s34
      %p40 = scmp.eq.s32.totalorder %s21, 0
      %p41 = por %p39, %p40
      %p42 = scmp.ne.s32.totalorder %s31, %s34
      %p43 = scmp.eq.s32.totalorder %s26, 1
      %p44 = por %p42, %p43
      %p45 = scmp.ne.s32.totalorder %s34, %s35
      %p46 = scmp.eq.s32.totalorder %s26, 0
      %p47 = por %p45, %p46
      %p48 = scmp.ne.s32.totalorder %s34, %s35
      %p49 = scmp.eq.s32.totalorder %s27, 1
      %p50 = por %p48, %p49
      %p52 = scmp.ne.s32.totalorder %s35, %s51
      %p53 = scmp.eq.s32.totalorder %s27, 0
      %p54 = por %p52, %p53
      %s56 = sadd.s32 %s55, 1
      %p59 = scmp.eq.s32.totalorder %s21, 1
      %p60 = scmp.ne.s32.totalorder %s55, %s57
      %p61 = scmp.eq.s32.totalorder %s21, 0
      %p62 = por %p60, %p61
      %p63 = scmp.ne.s32.totalorder %s55, %s57
      %p64 = scmp.eq.s32.totalorder %s26, 1
      %p65 = por %p63, %p64
      %p66 = scmp.ne.s32.totalorder %s57, %s58
      %p67 = scmp.eq.s32.totalorder %s26, 0
      %p68 = por %p66, %p67
      %p69 = scmp.ne.s32.totalorder %s57, %s58
      %p70 = scmp.eq.s32.totalorder %s27, 1
      %p71 = por %p69, %p70
      %p73 = scmp.ne.s32.totalorder %s58, %s72
      %p74 = scmp.eq.s32.totalorder %s27, 0
      %p75 = por %p73, %p74
      %s77 = sadd.s32 %s76, 1
      %p80 = scmp.eq.s32.totalorder %s21, 1
      %p81 = scmp.ne.s32.totalorder %s76, %s78
      %p82 = scmp.eq.s32.totalorder %s21, 0
      %p83 = por %p81, %p82
      %p84 = scmp.ne.s32.totalorder %s76, %s78
      %p85 = scmp.eq.s32.totalorder %s26, 1
      %p86 = por %p84, %p85
      %p87 = scmp.ne.s32.totalorder %s78, %s79
      %p88 = scmp.eq.s32.totalorder %s26, 0
      %p89 = por %p87, %p88
      %p90 = scmp.ne.s32.totalorder %s78, %s79
      %p91 = scmp.eq.s32.totalorder %s27, 1
      %p92 = por %p90, %p91
      %p94 = scmp.ne.s32.totalorder %s79, %s93
      %p95 = scmp.eq.s32.totalorder %s27, 0
      %p96 = por %p94, %p95
      %s98 = sadd.s32 %s97, 1
      %p101 = scmp.eq.s32.totalorder %s21, 1
      %p102 = scmp.ne.s32.totalorder %s97, %s99
      %p103 = scmp.eq.s32.totalorder %s21, 0
      %p104 = por %p102, %p103
      %p105 = scmp.ne.s32.totalorder %s97, %s99
      %p106 = scmp.eq.s32.totalorder %s26, 1
      %p107 = por %p105, %p106
      %p108 = scmp.ne.s32.totalorder %s99, %s100
      %p109 = scmp.eq.s32.totalorder %s26, 0
      %p110 = por %p108, %p109
      %p111 = scmp.ne.s32.totalorder %s99, %s100
      %p112 = scmp.eq.s32.totalorder %s27, 1
      %p113 = por %p111, %p112
      %p115 = scmp.ne.s32.totalorder %s100, %s114
      %p116 = scmp.eq.s32.totalorder %s27, 0
      %p117 = por %p115, %p116
      %s119 = sadd.s32 %s118, 1
      %p122 = scmp.eq.s32.totalorder %s21, 1
      %p123 = scmp.ne.s32.totalorder %s118, %s120
      %p124 = scmp.eq.s32.totalorder %s21, 0
      %p125 = por %p123, %p124
      %p126 = scmp.ne.s32.totalorder %s118, %s120
      %p127 = scmp.eq.s32.totalorder %s26, 1
      %p128 = por %p126, %p127
      %p129 = scmp.ne.s32.totalorder %s120, %s121
      %p130 = scmp.eq.s32.totalorder %s26, 0
      %p131 = por %p129, %p130
      %p132 = scmp.ne.s32.totalorder %s120, %s121
      %p133 = scmp.eq.s32.totalorder %s27, 1
      %p134 = por %p132, %p133
      %p136 = scmp.ne.s32.totalorder %s121, %s135
      %p137 = scmp.eq.s32.totalorder %s27, 0
      %p138 = por %p136, %p137
      %s140 = sadd.s32 %s139, 1
      %p143 = scmp.eq.s32.totalorder %s21, 1
      %p144 = scmp.ne.s32.totalorder %s139, %s141
      %p145 = scmp.eq.s32.totalorder %s21, 0
      %p146 = por %p144, %p145
      %p147 = scmp.ne.s32.totalorder %s139, %s141
      %p148 = scmp.eq.s32.totalorder %s26, 1
      %p149 = por %p147, %p148
      %p150 = scmp.ne.s32.totalorder %s141, %s142
      %p151 = scmp.eq.s32.totalorder %s26, 0
      %p152 = por %p150, %p151
      %p153 = scmp.ne.s32.totalorder %s141, %s142
      %p154 = scmp.eq.s32.totalorder %s27, 1
      %p155 = por %p153, %p154
      %p157 = scmp.ne.s32.totalorder %s142, %s156
      %p158 = scmp.eq.s32.totalorder %s27, 0
      %p159 = por %p157, %p158
      %s161 = sadd.s32 %s160, 1
      %p164 = scmp.eq.s32.totalorder %s21, 1
      %p165 = scmp.ne.s32.totalorder %s160, %s162
      %p166 = scmp.eq.s32.totalorder %s21, 0
      %p167 = por %p165, %p166
      %p168 = scmp.ne.s32.totalorder %s160, %s162
      %p169 = scmp.eq.s32.totalorder %s26, 1
      %p170 = por %p168, %p169
      %p171 = scmp.ne.s32.totalorder %s162, %s163
      %p172 = scmp.eq.s32.totalorder %s26, 0
      %p173 = por %p171, %p172
      %p174 = scmp.ne.s32.totalorder %s162, %s163
      %p175 = scmp.eq.s32.totalorder %s27, 1
      %p176 = por %p174, %p175
      %p178 = scmp.ne.s32.totalorder %s163, %s177
      %p179 = scmp.eq.s32.totalorder %s27, 0
      %p180 = por %p178, %p179
      %s181 = ssub.s32 %s21, %s28
      %p182 = scmp.eq.s32.totalorder %s181, 0
      %s184 = sadd.s32 %s183, 1
      %s185 = scalar_select %p182, %s183, %s184
      %p188 = pneg %p182
      %p189 = scmp.eq.s32.totalorder %s21, 1
      %p190 = por %p188, %p189
      %p191 = scmp.ne.s32.totalorder %s183, %s186
      %p192 = scmp.eq.s32.totalorder %s21, 0
      %p193 = por %p191, %p192
      %p194 = scmp.ne.s32.totalorder %s183, %s186
      %p195 = scmp.eq.s32.totalorder %s26, 1
      %p196 = por %p194, %p195
      %p197 = scmp.ne.s32.totalorder %s186, %s187
      %p198 = scmp.eq.s32.totalorder %s26, 0
      %p199 = por %p197, %p198
      %p200 = scmp.ne.s32.totalorder %s186, %s187
      %p201 = scmp.eq.s32.totalorder %s27, 1
      %p202 = por %p200, %p201
      %p204 = scmp.ne.s32.totalorder %s187, %s203
      %p205 = scmp.eq.s32.totalorder %s27, 0
      %p206 = por %p204, %p205
      %p207 = scmp.le.s32.totalorder 1, %s21
      %p208 = scmp.lt.s32.totalorder %s21, 3
      %p209 = pnand %p207, %p208
      %p210 = pneg %p209
      // Predicated region
      $region9: #{tpu_custom_call.1} parent=5 // pred_check
        _
      $region10: #{tpu_custom_call.1} parent=5 // pred_check_branch
        %212 = sbr.rel (%p209) target = $region12
      $region11: #{tpu_custom_call.1} parent=5 // pred_region
        %s213 = ssub.s32 %s21, 1
        // Predicated region
        $region13: #{tpu_custom_call.1} parent=11 // pred_check
          %p214 = pneg %p68
        $region14: #{tpu_custom_call.1} parent=11 // pred_check_branch
          %216 = sbr.rel (%p214) target = $region16
        $region15: #{tpu_custom_call.1} parent=11 // pred_region
          %s218 = ssub.s32 256, 256
          %219 = vsyncadd [#allocation6], %s218
          %s220 = sshll.u32 [#allocation5], 4
          %s221 = int_to_ptr.vmem [resolvable:$true] %s220
          %226 = dma.hbm_to_vmem [thread:$0]  %s1, 256, %s221, [#allocation6], 64, 64, 4
        $region16: #{tpu_custom_call.1} parent=11 // pred_fallthru
          _
        // Predicated region
        $region17: #{tpu_custom_call.1} parent=11 // pred_check
          %p227 = pneg %p89
        $region18: #{tpu_custom_call.1} parent=11 // pred_check_branch
          %229 = sbr.rel (%p227) target = $region20
        $region19: #{tpu_custom_call.1} parent=11 // pred_region
          _
        $region20: #{tpu_custom_call.1} parent=11 // pred_fallthru
          _
        // Predicated region
        $region21: #{tpu_custom_call.1} parent=11 // pred_check
          %p230 = pneg %p110
        $region22: #{tpu_custom_call.1} parent=11 // pred_check_branch
          %232 = sbr.rel (%p230) target = $region24
        $region23: #{tpu_custom_call.1} parent=11 // pred_region
          %s234 = ssub.s32 2048, 2048
          %235 = vsyncadd [#allocation6], %s234
          %s236 = sshll.u32 [#allocation7], 4
          %s237 = int_to_ptr.vmem [resolvable:$true] %s236
          %242 = dma.hbm_to_vmem [thread:$0]  %s3, 2048, %s237, [#allocation6], 64, 64, 4
        $region24: #{tpu_custom_call.1} parent=11 // pred_fallthru
          _
        // Predicated region
        $region25: #{tpu_custom_call.1} parent=11 // pred_check
          %p243 = pneg %p131
        $region26: #{tpu_custom_call.1} parent=11 // pred_check_branch
          %245 = sbr.rel (%p243) target = $region28
        $region27: #{tpu_custom_call.1} parent=11 // pred_region
          _
        $region28: #{tpu_custom_call.1} parent=11 // pred_fallthru
          _
        // Predicated region
        $region29: #{tpu_custom_call.1} parent=11 // pred_check
          %p246 = pneg %p152
        $region30: #{tpu_custom_call.1} parent=11 // pred_check_branch
          %248 = sbr.rel (%p246) target = $region32
        $region31: #{tpu_custom_call.1} parent=11 // pred_region
          %s250 = ssub.s32 1024, 1024
          %251 = vsyncadd [#allocation9], %s250
          %s252 = sshll.u32 [#allocation8], 4
          %s253 = int_to_ptr.vmem [resolvable:$true] %s252
          %258 = dma.hbm_to_vmem [thread:$0]  %s5, 1024, %s253, [#allocation9], 64, 64, 4
        $region32: #{tpu_custom_call.1} parent=11 // pred_fallthru
          _
        // Predicated region
        $region33: #{tpu_custom_call.1} parent=11 // pred_check
          %p259 = pneg %p173
        $region34: #{tpu_custom_call.1} parent=11 // pred_check_branch
          %261 = sbr.rel (%p259) target = $region36
        $region35: #{tpu_custom_call.1} parent=11 // pred_region
          _
        $region36: #{tpu_custom_call.1} parent=11 // pred_fallthru
          _
      $region12: #{tpu_custom_call.1} parent=5 // pred_fallthru
        _
      %p262 = scmp.lt.s32.totalorder %s21, 2
      // Predicated region
      $region37: #{tpu_custom_call.1} parent=5 // pred_check
        %p263 = pneg %p262
      $region38: #{tpu_custom_call.1} parent=5 // pred_check_branch
        %265 = sbr.rel (%p263) target = $region40
      $region39: #{tpu_custom_call.1} parent=5 // pred_region
        // Predicated region
        $region41: #{tpu_custom_call.1} parent=39 // pred_check
          %p266 = pneg %p41
        $region42: #{tpu_custom_call.1} parent=39 // pred_check_branch
          %268 = sbr.rel (%p266) target = $region44
        $region43: #{tpu_custom_call.1} parent=39 // pred_region
          %s269 = sand.u32 %s31, 1
          %s270 = scalar_lea.sflag [#allocation3], %s269
          %s271 = sand.u32 %s31, 1
          %s272 = smul.addr %s271, 16
          %s273 = scalar_lea.vmem [#allocation2], %s272
          %s274 = smul.u32 2, %s21
          %s276 = ssub.s32 256, 256
          %277 = vsyncadd %s270, %s276
          %s278 = smul.addr %s274, 128
          %s279 = scalar_lea.hbm %s0, %s278
          %s280 = sshll.u32 %s273, 4
          %s281 = int_to_ptr.vmem [resolvable:$true] %s280
          %286 = dma.hbm_to_vmem [thread:$0]  %s279, 256, %s281, %s270, 128, 128, 8
        $region44: #{tpu_custom_call.1} parent=39 // pred_fallthru
          _
      $region40: #{tpu_custom_call.1} parent=5 // pred_fallthru
        _
      %p287 = scmp.le.s32.totalorder 1, %s21
      %p288 = scmp.lt.s32.totalorder %s21, 3
      %p289 = pnand %p287, %p288
      %p290 = pneg %p289
      // Predicated region
      $region45: #{tpu_custom_call.1} parent=5 // pred_check
        _
      $region46: #{tpu_custom_call.1} parent=5 // pred_check_branch
        %292 = sbr.rel (%p289) target = $region48
      $region47: #{tpu_custom_call.1} parent=5 // pred_region
        %s293 = ssub.s32 %s21, 1
        %s294 = sand.u32 %s34, 1
        %s295 = scalar_lea.sflag [#allocation3], %s294
        %s296 = sand.u32 %s34, 1
        %s297 = smul.addr %s296, 16
        %s298 = scalar_lea.vmem [#allocation2], %s297
        // Predicated region
        $region49: #{tpu_custom_call.1} parent=47 // pred_check
          %p299 = pneg %p47
        $region50: #{tpu_custom_call.1} parent=47 // pred_check_branch
          %301 = sbr.rel (%p299) target = $region52
        $region51: #{tpu_custom_call.1} parent=47 // pred_region
          %302 = dma.done %s295, 256
        $region52: #{tpu_custom_call.1} parent=47 // pred_fallthru
          _
        // Predicated region
        $region53: #{tpu_custom_call.1} parent=47 // pred_check
          %p303 = pneg %p68
        $region54: #{tpu_custom_call.1} parent=47 // pred_check_branch
          %305 = sbr.rel (%p303) target = $region56
        $region55: #{tpu_custom_call.1} parent=47 // pred_region
          %306 = dma.done [#allocation6], 256
        $region56: #{tpu_custom_call.1} parent=47 // pred_fallthru
          _
        // Predicated region
        $region57: #{tpu_custom_call.1} parent=47 // pred_check
          %p307 = pneg %p110
        $region58: #{tpu_custom_call.1} parent=47 // pred_check_branch
          %309 = sbr.rel (%p307) target = $region60
        $region59: #{tpu_custom_call.1} parent=47 // pred_region
          %310 = dma.done [#allocation6], 2048
        $region60: #{tpu_custom_call.1} parent=47 // pred_fallthru
          _
        // Predicated region
        $region61: #{tpu_custom_call.1} parent=47 // pred_check
          %p311 = pneg %p152
        $region62: #{tpu_custom_call.1} parent=47 // pred_check_branch
          %313 = sbr.rel (%p311) target = $region64
        $region63: #{tpu_custom_call.1} parent=47 // pred_region
          %314 = dma.done [#allocation9], 1024
        $region64: #{tpu_custom_call.1} parent=47 // pred_fallthru
          _
        %s315 = sand.u32 %s34, 1
        %s316 = scalar_lea.sflag [#allocation3], %s315
        %s317 = sand.u32 %s34, 1
        %s318 = smul.addr %s317, 16
        %s319 = scalar_lea.vmem [#allocation2], %s318
        %p320 = pneg %p47
        %p321 = pneg %p44
        %p322 = pneg %p68
        %p323 = pneg %p65
        %p324 = pneg %p89
        %p325 = pneg %p86
        %p326 = pneg %p110
        %p327 = pneg %p107
        %p328 = pneg %p131
        %p329 = pneg %p128
        %p330 = pneg %p152
        %p331 = pneg %p149
        %p332 = pneg %p173
        %p333 = pneg %p170
        %p334 = pneg %p199
        %p335 = pneg %p196
        %s336 = sand.u32 %s186, 1
        %s337 = scalar_lea.sflag [#allocation4], %s336
        %s338 = sand.u32 %s186, 1
        %s339 = smul.addr %s338, 16
        %s340 = scalar_lea.vmem [#allocation10], %s339
        %s341 = smul.u32 2, %s26
        %s342 = smul.u32 2, %s26
        %v344 = vld [vmem:[#allocation5] sm:$0xf]
        %v345 = vld [vmem:[#allocation5 + $0x4] sm:$0xf]
        %v346 = vld [vmem:[#allocation5 + $0x8] sm:$0xf]
        %v347 = vld [vmem:[#allocation5 + $0xc] sm:$0xf]
        %v348 = vld [vmem:[%s298] sm:$0xff]
        %v349 = vld [vmem:[%s298 + $0x8] sm:$0xff]
        %v350 = vpack.c.bf16 %v349, %v348
        %v351 = vld [vmem:[%s2] sm:$0x1]
        %v353 = vlaneseq
        %v354 = vshrl.u32 %v353, 7
        %v355 = vsub.s32 0, %v354
        %v356 = vrot.slane %v351, %v355
        %v362 = vunpack.c.l.b16 %v344
        %v363 = vunpack.c.l.b16 %v345
        %v364 = vunpack.c.l.b16 %v346
        %v365 = vunpack.c.l.b16 %v347
        %v366 = vpack.c.b16 %v363, %v362
        %v367 = vpack.c.b16 %v365, %v364
        %vm370 = vcmask 261120
        %v372 = vsel %vm370, %v350, 0
        %374 = vmatprep.subr.bf16.mxu0 0
        %375 = vmatpush1.bf16.msra.mxu0 %v366
        %376 = vmatprep.subr.bf16.mxu0 0
        %377 = vmatpush1.bf16.msra.mxu0 %v367
        %378 = vmatprep.subr.bf16.mxu0 0
        %379 = vmatpush1.bf16.msra.mxu0 0
        %380 = vmatprep.subr.bf16.mxu0 0
        %381 = vmatpush1.bf16.msra.mxu0 0
        %382 = vmatprep.subr.bf16.mxu0 0
        %383 = vmatpush1.bf16.msra.mxu0 0
        %384 = vmatprep.subr.bf16.mxu0 0
        %385 = vmatpush1.bf16.msra.mxu0 0
        %386 = vmatprep.subr.bf16.mxu0 0
        %387 = vmatpush1.bf16.msra.mxu0 0
        %388 = vmatprep.subr.bf16.mxu0 0
        %389 = vmatpush1.bf16.msra.mxu0 0
        %390 = vmatprep.subr.bf16.mxu0 0
        %391 = vmatpush1.bf16.msra.mxu0 0
        %392 = vmatprep.subr.bf16.mxu0 0
        %393 = vmatpush1.bf16.msra.mxu0 0
        %394 = vmatprep.subr.bf16.mxu0 0
        %395 = vmatpush1.bf16.msra.mxu0 0
        %396 = vmatprep.subr.bf16.mxu0 0
        %397 = vmatpush1.bf16.msra.mxu0 0
        %398 = vmatprep.subr.bf16.mxu0 0
        %399 = vmatpush1.bf16.msra.mxu0 0
        %400 = vmatprep.subr.bf16.mxu0 0
        %401 = vmatpush1.bf16.msra.mxu0 0
        %402 = vmatprep.subr.bf16.mxu0 0
        %403 = vmatpush1.bf16.msra.mxu0 0
        %404 = vmatprep.subr.bf16.mxu0 0
        %405 = vmatpush1.bf16.msra.mxu0 0
        %406 = vmatprep.mubr.bf16.mxu0 0
        %407 = vmatmul.mubr.bf16.gmra.mrb[0].mxu0 %v372
        %v408 = vpop.f32.mrb[0].mxu0
        %v409 = vadd.f32 %v356, %v408
        %v410 = vpop.f32.mrb[0].mxu0
        %v411 = vpop.f32.mrb[0].mxu0
        %v412 = vadd.f32 %v356, %v411
        %v413 = vpop.f32.mrb[0].mxu0
        %414 = vdwg.mxu0
        %v415 = vmax.f32 %v409, 0.0
        %v416 = vmax.f32 %v412, 0.0
        %v417 = vld [vmem:[#allocation7] sm:$0xf]
        %v418 = vld [vmem:[#allocation7 + $0x4] sm:$0xf]
        %v419 = vld [vmem:[#allocation7 + $0x8] sm:$0xf]
        %v420 = vld [vmem:[#allocation7 + $0xc] sm:$0xf]
        %v421 = vld [vmem:[#allocation7 + $0x10] sm:$0xf]
        %v422 = vld [vmem:[#allocation7 + $0x14] sm:$0xf]
        %v423 = vld [vmem:[#allocation7 + $0x18] sm:$0xf]
        %v424 = vld [vmem:[#allocation7 + $0x1c] sm:$0xf]
        %v425 = vld [vmem:[#allocation7 + $0x20] sm:$0xf]
        %v426 = vld [vmem:[#allocation7 + $0x24] sm:$0xf]
        %v427 = vld [vmem:[#allocation7 + $0x28] sm:$0xf]
        %v428 = vld [vmem:[#allocation7 + $0x2c] sm:$0xf]
        %v429 = vld [vmem:[#allocation7 + $0x30] sm:$0xf]
        %v430 = vld [vmem:[#allocation7 + $0x34] sm:$0xf]
        %v431 = vld [vmem:[#allocation7 + $0x38] sm:$0xf]
        %v432 = vld [vmem:[#allocation7 + $0x3c] sm:$0xf]
        %v433 = vpack.c.bf16 %v416, %v415
        %v434 = vld [vmem:[%s4] sm:$0x1]
        %v436 = vlaneseq
        %v437 = vshrl.u32 %v436, 7
        %v438 = vsub.s32 0, %v437
        %v439 = vrot.slane %v434, %v438
        %v457 = vunpack.c.l.b16 %v417
        %v458 = vunpack.c.l.b16 %v418
        %v459 = vunpack.c.l.b16 %v419
        %v460 = vunpack.c.l.b16 %v420
        %v461 = vunpack.c.l.b16 %v421
        %v462 = vunpack.c.l.b16 %v422
        %v463 = vunpack.c.l.b16 %v423
        %v464 = vunpack.c.l.b16 %v424
        %v465 = vunpack.c.l.b16 %v425
        %v466 = vunpack.c.l.b16 %v426
        %v467 = vunpack.c.l.b16 %v427
        %v468 = vunpack.c.l.b16 %v428
        %v469 = vunpack.c.l.b16 %v429
        %v470 = vunpack.c.l.b16 %v430
        %v471 = vunpack.c.l.b16 %v431
        %v472 = vunpack.c.l.b16 %v432
        %v473 = vpack.c.b16 %v458, %v457
        %v474 = vpack.c.b16 %v460, %v459
        %v475 = vpack.c.b16 %v462, %v461
        %v476 = vpack.c.b16 %v464, %v463
        %v477 = vpack.c.b16 %v466, %v465
        %v478 = vpack.c.b16 %v468, %v467
        %v479 = vpack.c.b16 %v470, %v469
        %v480 = vpack.c.b16 %v472, %v471
        %489 = vmatprep.subr.bf16.mxu0 0
        %490 = vmatpush1.bf16.msra.mxu0 %v473
        %491 = vmatprep.subr.bf16.mxu0 0
        %492 = vmatpush1.bf16.msra.mxu0 %v474
        %493 = vmatprep.subr.bf16.mxu0 0
        %494 = vmatpush1.bf16.msra.mxu0 %v475
        %495 = vmatprep.subr.bf16.mxu0 0
        %496 = vmatpush1.bf16.msra.mxu0 %v476
        %497 = vmatprep.subr.bf16.mxu0 0
        %498 = vmatpush1.bf16.msra.mxu0 %v477
        %499 = vmatprep.subr.bf16.mxu0 0
        %500 = vmatpush1.bf16.msra.mxu0 %v478
        %501 = vmatprep.subr.bf16.mxu0 0
        %502 = vmatpush1.bf16.msra.mxu0 %v479
        %503 = vmatprep.subr.bf16.mxu0 0
        %504 = vmatpush1.bf16.msra.mxu0 %v480
        %505 = vmatprep.subr.bf16.mxu0 0
        %506 = vmatpush1.bf16.msra.mxu0 0
        %507 = vmatprep.subr.bf16.mxu0 0
        %508 = vmatpush1.bf16.msra.mxu0 0
        %509 = vmatprep.subr.bf16.mxu0 0
        %510 = vmatpush1.bf16.msra.mxu0 0
        %511 = vmatprep.subr.bf16.mxu0 0
        %512 = vmatpush1.bf16.msra.mxu0 0
        %513 = vmatprep.subr.bf16.mxu0 0
        %514 = vmatpush1.bf16.msra.mxu0 0
        %515 = vmatprep.subr.bf16.mxu0 0
        %516 = vmatpush1.bf16.msra.mxu0 0
        %517 = vmatprep.subr.bf16.mxu0 0
        %518 = vmatpush1.bf16.msra.mxu0 0
        %519 = vmatprep.subr.bf16.mxu0 0
        %520 = vmatpush1.bf16.msra.mxu0 0
        %521 = vmatprep.mubr.bf16.mxu0 0
        %522 = vmatmul.mubr.bf16.gmra.mrb[0].mxu0 %v433
        %v523 = vpop.f32.mrb[0].mxu0
        %v524 = vadd.f32 %v439, %v523
        %v525 = vpop.f32.mrb[0].mxu0
        %v526 = vpop.f32.mrb[0].mxu0
        %v527 = vadd.f32 %v439, %v526
        %v528 = vpop.f32.mrb[0].mxu0
        %529 = vdwg.mxu0
        %v530 = vmax.f32 %v524, 0.0
        %v531 = vmax.f32 %v527, 0.0
        %s532 = scalar_lea.vmem [#allocation7], 64
        %v533 = vld [vmem:[%s532] sm:$0xf]
        %v534 = vld [vmem:[%s532 + $0x4] sm:$0xf]
        %v535 = vld [vmem:[%s532 + $0x8] sm:$0xf]
        %v536 = vld [vmem:[%s532 + $0xc] sm:$0xf]
        %v537 = vld [vmem:[%s532 + $0x10] sm:$0xf]
        %v538 = vld [vmem:[%s532 + $0x14] sm:$0xf]
        %v539 = vld [vmem:[%s532 + $0x18] sm:$0xf]
        %v540 = vld [vmem:[%s532 + $0x1c] sm:$0xf]
        %v541 = vld [vmem:[%s532 + $0x20] sm:$0xf]
        %v542 = vld [vmem:[%s532 + $0x24] sm:$0xf]
        %v543 = vld [vmem:[%s532 + $0x28] sm:$0xf]
        %v544 = vld [vmem:[%s532 + $0x2c] sm:$0xf]
        %v545 = vld [vmem:[%s532 + $0x30] sm:$0xf]
        %v546 = vld [vmem:[%s532 + $0x34] sm:$0xf]
        %v547 = vld [vmem:[%s532 + $0x38] sm:$0xf]
        %v548 = vld [vmem:[%s532 + $0x3c] sm:$0xf]
        %v549 = vpack.c.bf16 %v531, %v530
        %s550 = scalar_lea.vmem %s4, 1
        %v551 = vld [vmem:[%s550] sm:$0x1]
        %v553 = vlaneseq
        %v554 = vshrl.u32 %v553, 7
        %v555 = vsub.s32 0, %v554
        %v556 = vrot.slane %v551, %v555
        %v574 = vunpack.c.l.b16 %v533
        %v575 = vunpack.c.l.b16 %v534
        %v576 = vunpack.c.l.b16 %v535
        %v577 = vunpack.c.l.b16 %v536
        %v578 = vunpack.c.l.b16 %v537
        %v579 = vunpack.c.l.b16 %v538
        %v580 = vunpack.c.l.b16 %v539
        %v581 = vunpack.c.l.b16 %v540
        %v582 = vunpack.c.l.b16 %v541
        %v583 = vunpack.c.l.b16 %v542
        %v584 = vunpack.c.l.b16 %v543
        %v585 = vunpack.c.l.b16 %v544
        %v586 = vunpack.c.l.b16 %v545
        %v587 = vunpack.c.l.b16 %v546
        %v588 = vunpack.c.l.b16 %v547
        %v589 = vunpack.c.l.b16 %v548
        %v590 = vpack.c.b16 %v575, %v574
        %v591 = vpack.c.b16 %v577, %v576
        %v592 = vpack.c.b16 %v579, %v578
        %v593 = vpack.c.b16 %v581, %v580
        %v594 = vpack.c.b16 %v583, %v582
        %v595 = vpack.c.b16 %v585, %v584
        %v596 = vpack.c.b16 %v587, %v586
        %v597 = vpack.c.b16 %v589, %v588
        %606 = vmatprep.subr.bf16.mxu0 0
        %607 = vmatpush1.bf16.msra.mxu0 %v590
        %608 = vmatprep.subr.bf16.mxu0 0
        %609 = vmatpush1.bf16.msra.mxu0 %v591
        %610 = vmatprep.subr.bf16.mxu0 0
        %611 = vmatpush1.bf16.msra.mxu0 %v592
        %612 = vmatprep.subr.bf16.mxu0 0
        %613 = vmatpush1.bf16.msra.mxu0 %v593
        %614 = vmatprep.subr.bf16.mxu0 0
        %615 = vmatpush1.bf16.msra.mxu0 %v594
        %616 = vmatprep.subr.bf16.mxu0 0
        %617 = vmatpush1.bf16.msra.mxu0 %v595
        %618 = vmatprep.subr.bf16.mxu0 0
        %619 = vmatpush1.bf16.msra.mxu0 %v596
        %620 = vmatprep.subr.bf16.mxu0 0
        %621 = vmatpush1.bf16.msra.mxu0 %v597
        %622 = vmatprep.subr.bf16.mxu0 0
        %623 = vmatpush1.bf16.msra.mxu0 0
        %624 = vmatprep.subr.bf16.mxu0 0
        %625 = vmatpush1.bf16.msra.mxu0 0
        %626 = vmatprep.subr.bf16.mxu0 0
        %627 = vmatpush1.bf16.msra.mxu0 0
        %628 = vmatprep.subr.bf16.mxu0 0
        %629 = vmatpush1.bf16.msra.mxu0 0
        %630 = vmatprep.subr.bf16.mxu0 0
        %631 = vmatpush1.bf16.msra.mxu0 0
        %632 = vmatprep.subr.bf16.mxu0 0
        %633 = vmatpush1.bf16.msra.mxu0 0
        %634 = vmatprep.subr.bf16.mxu0 0
        %635 = vmatpush1.bf16.msra.mxu0 0
        %636 = vmatprep.subr.bf16.mxu0 0
        %637 = vmatpush1.bf16.msra.mxu0 0
        %638 = vmatprep.mubr.bf16.mxu0 0
        %639 = vmatmul.mubr.bf16.gmra.mrb[0].mxu0 %v549
        %v640 = vpop.f32.mrb[0].mxu0
        %v641 = vadd.f32 %v556, %v640
        %v642 = vpop.f32.mrb[0].mxu0
        %v643 = vpop.f32.mrb[0].mxu0
        %v644 = vadd.f32 %v556, %v643
        %v645 = vpop.f32.mrb[0].mxu0
        %646 = vdwg.mxu0
        %v647 = vmax.f32 %v641, 0.0
        %v648 = vmax.f32 %v644, 0.0
        %v649 = vld [vmem:[#allocation8] sm:$0xf]
        %v650 = vld [vmem:[#allocation8 + $0x4] sm:$0xf]
        %v651 = vld [vmem:[#allocation8 + $0x8] sm:$0xf]
        %v652 = vld [vmem:[#allocation8 + $0xc] sm:$0xf]
        %v653 = vld [vmem:[#allocation8 + $0x10] sm:$0xf]
        %v654 = vld [vmem:[#allocation8 + $0x14] sm:$0xf]
        %v655 = vld [vmem:[#allocation8 + $0x18] sm:$0xf]
        %v656 = vld [vmem:[#allocation8 + $0x1c] sm:$0xf]
        %v657 = vld [vmem:[#allocation8 + $0x20] sm:$0xf]
        %v658 = vld [vmem:[#allocation8 + $0x24] sm:$0xf]
        %v659 = vld [vmem:[#allocation8 + $0x28] sm:$0xf]
        %v660 = vld [vmem:[#allocation8 + $0x2c] sm:$0xf]
        %v661 = vld [vmem:[#allocation8 + $0x30] sm:$0xf]
        %v662 = vld [vmem:[#allocation8 + $0x34] sm:$0xf]
        %v663 = vld [vmem:[#allocation8 + $0x38] sm:$0xf]
        %v664 = vld [vmem:[#allocation8 + $0x3c] sm:$0xf]
        %v665 = vpack.c.bf16 %v648, %v647
        %v666 = vld [vmem:[%s6] sm:$0x1]
        %v668 = vlaneseq
        %v669 = vshrl.u32 %v668, 7
        %v670 = vsub.s32 0, %v669
        %v671 = vrot.slane %v666, %v670
        %v689 = vunpack.c.l.b16 %v649
        %v690 = vunpack.c.l.b16 %v650
        %v691 = vunpack.c.l.b16 %v651
        %v692 = vunpack.c.l.b16 %v652
        %v693 = vunpack.c.l.b16 %v653
        %v694 = vunpack.c.l.b16 %v654
        %v695 = vunpack.c.l.b16 %v655
        %v696 = vunpack.c.l.b16 %v656
        %v697 = vunpack.c.l.b16 %v657
        %v698 = vunpack.c.l.b16 %v658
        %v699 = vunpack.c.l.b16 %v659
        %v700 = vunpack.c.l.b16 %v660
        %v701 = vunpack.c.l.b16 %v661
        %v702 = vunpack.c.l.b16 %v662
        %v703 = vunpack.c.l.b16 %v663
        %v704 = vunpack.c.l.b16 %v664
        %v705 = vpack.c.b16 %v690, %v689
        %v706 = vpack.c.b16 %v692, %v691
        %v707 = vpack.c.b16 %v694, %v693
        %v708 = vpack.c.b16 %v696, %v695
        %v709 = vpack.c.b16 %v698, %v697
        %v710 = vpack.c.b16 %v700, %v699
        %v711 = vpack.c.b16 %v702, %v701
        %v712 = vpack.c.b16 %v704, %v703
        %721 = vmatprep.subr.bf16.mxu0 0
        %722 = vmatpush1.bf16.msra.mxu0 %v705
        %723 = vmatprep.subr.bf16.mxu0 0
        %724 = vmatpush1.bf16.msra.mxu0 %v706
        %725 = vmatprep.subr.bf16.mxu0 0
        %726 = vmatpush1.bf16.msra.mxu0 %v707
        %727 = vmatprep.subr.bf16.mxu0 0
        %728 = vmatpush1.bf16.msra.mxu0 %v708
        %729 = vmatprep.subr.bf16.mxu0 0
        %730 = vmatpush1.bf16.msra.mxu0 %v709
        %731 = vmatprep.subr.bf16.mxu0 0
        %732 = vmatpush1.bf16.msra.mxu0 %v710
        %733 = vmatprep.subr.bf16.mxu0 0
        %734 = vmatpush1.bf16.msra.mxu0 %v711
        %735 = vmatprep.subr.bf16.mxu0 0
        %736 = vmatpush1.bf16.msra.mxu0 %v712
        %737 = vmatprep.subr.bf16.mxu0 0
        %738 = vmatpush1.bf16.msra.mxu0 0
        %739 = vmatprep.subr.bf16.mxu0 0
        %740 = vmatpush1.bf16.msra.mxu0 0
        %741 = vmatprep.subr.bf16.mxu0 0
        %742 = vmatpush1.bf16.msra.mxu0 0
        %743 = vmatprep.subr.bf16.mxu0 0
        %744 = vmatpush1.bf16.msra.mxu0 0
        %745 = vmatprep.subr.bf16.mxu0 0
        %746 = vmatpush1.bf16.msra.mxu0 0
        %747 = vmatprep.subr.bf16.mxu0 0
        %748 = vmatpush1.bf16.msra.mxu0 0
        %749 = vmatprep.subr.bf16.mxu0 0
        %750 = vmatpush1.bf16.msra.mxu0 0
        %751 = vmatprep.subr.bf16.mxu0 0
        %752 = vmatpush1.bf16.msra.mxu0 0
        %753 = vmatprep.mubr.bf16.mxu0 0
        %754 = vmatmul.mubr.bf16.gmra.mrb[0].mxu0 %v665
        %v755 = vpop.f32.mrb[0].mxu0
        %v756 = vadd.f32 %v671, %v755
        %v757 = vpop.f32.mrb[0].mxu0
        %v758 = vpop.f32.mrb[0].mxu0
        %v759 = vadd.f32 %v671, %v758
        %v760 = vpop.f32.mrb[0].mxu0
        %761 = vdwg.mxu0
        %v762 = vtanh.pop %v756
        %v763 = vtanh.pop %v759
        %764 = vst [vmem:[%s340] sm:$0xff] %v762
        %765 = vst [vmem:[%s340 + $0x8] sm:$0xff] %v763
        %s766 = sand.u32 %s186, 1
        %s767 = scalar_lea.sflag [#allocation4], %s766
        %s768 = sand.u32 %s186, 1
        %s769 = smul.addr %s768, 16
        %s770 = scalar_lea.vmem [#allocation10], %s769
        // Predicated region
        $region65: #{tpu_custom_call.1} parent=47 // pred_check
          %p771 = pneg %p196
        $region66: #{tpu_custom_call.1} parent=47 // pred_check_branch
          %773 = sbr.rel (%p771) target = $region68
        $region67: #{tpu_custom_call.1} parent=47 // pred_region
          %s774 = smul.u32 2, %s26
          %s776 = ssub.s32 256, 256
          %777 = vsyncadd %s767, %s776
          %s778 = smul.addr %s774, 128
          %s779 = scalar_lea.hbm %s7, %s778
          %s780 = sshll.u32 %s770, 4
          %s781 = int_to_ptr.vmem [resolvable:$true] %s780
          %786 = dma.vmem_to_hbm [thread:$0]  %s781, 256, %s779, %s767, 128, 128, 8
        $region68: #{tpu_custom_call.1} parent=47 // pred_fallthru
          _
      $region48: #{tpu_custom_call.1} parent=5 // pred_fallthru
        _
      %p787 = scmp.le.s32.totalorder 2, %s21
      // Predicated region
      $region69: #{tpu_custom_call.1} parent=5 // pred_check
        %p788 = pneg %p787
      $region70: #{tpu_custom_call.1} parent=5 // pred_check_branch
        %790 = sbr.rel (%p788) target = $region72
      $region71: #{tpu_custom_call.1} parent=5 // pred_region
        %s791 = ssub.s32 %s21, 2
        // Predicated region
        $region73: #{tpu_custom_call.1} parent=71 // pred_check
          %p792 = pneg %p202
        $region74: #{tpu_custom_call.1} parent=71 // pred_check_branch
          %794 = sbr.rel (%p792) target = $region76
        $region75: #{tpu_custom_call.1} parent=71 // pred_region
          %s795 = sand.u32 %s187, 1
          %s796 = scalar_lea.sflag [#allocation4], %s795
          %s797 = sand.u32 %s187, 1
          %s798 = smul.addr %s797, 16
          %s799 = scalar_lea.vmem [#allocation10], %s798
          %800 = dma.done %s796, 256
        $region76: #{tpu_custom_call.1} parent=71 // pred_fallthru
          _
      $region72: #{tpu_custom_call.1} parent=5 // pred_fallthru
        _
    $region6: #{tpu_custom_call.1} parent=1 // loop_footer
      %s25 = sadd.s32 1, %s21
    $region7: #{tpu_custom_call.1} parent=1 // loop_footer_branch
      %20 = sbr.rel target = $region3
    $region8: #{tpu_custom_call.1} parent=1 // loop_exit
      _
    %801 = vsyncpa [#allocation3], 1
    %s802 = scalar_lea.sflag [#allocation3], 1
    %803 = vsyncpa %s802, 1
    %804 = vsyncpa [#allocation6], 1
    %805 = vsyncpa [#allocation9], 1
    %806 = vsyncpa [#allocation4], 1
    %s807 = scalar_lea.sflag [#allocation4], 1
    %808 = vsyncpa %s807, 1

</llo_original>
